<compile_context>
chip_gen: v5e
topology: v5e:2x2
jax: 0.10.0
libtpu: 0.0.40
codegen_flags: <defaults>
</compile_context>

<pallas_src>
import functools

import jax
import jax.numpy as jnp
import numpy as np
from jax.experimental import pallas as pl
from jax.experimental.pallas import tpu as pltpu


def mkra_kernel(x_ref,
                wtap_ref, bconv_ref,
                wc1_ref, bc1_ref, wc2_ref, bc2_ref,
                wp1_ref, bp1_ref, wp2_ref, bp2_ref,
                out_ref, *, H, W, C):
    HW = H * W
    P = W + 1                                   # flat halo width on each side

    x = x_ref[0]                                # (C, HW) bf16, lane-dense
    iden = x.astype(jnp.float32)                # residual straight from input

    # Zero-padded flat image: every conv tap becomes a static lane-offset
    # slice of this (C, HW + 2P) value (no halo scratch, no im2col scratch).
    zpad = jnp.zeros((C, P), jnp.bfloat16)
    xpad = jnp.concatenate([zpad, x, zpad], axis=1)          # (C, HW + 2P)

    # per-lane w coordinate, to mask the horizontal wrap of the flat shift
    wcol = jax.lax.broadcasted_iota(jnp.int32, (1, HW), 1) % W
    m_left = wcol >= 1
    m_right = wcol <= W - 2

    # ---- merged 3x3 conv (all four re-param branches): 9 accumulated MXU
    # matmuls, shape (C,C) @ (C,HW) so the MXU N-dim is HW ---------------------
    acc = jnp.zeros((C, HW), jnp.float32)
    for kh in range(3):
        for kw in range(3):
            off = (kh - 1) * W + (kw - 1)
            tap = xpad[:, P + off:P + off + HW]              # (C, HW) bf16
            if kw == 0:
                tap = jnp.where(m_left, tap, 0.0)
            elif kw == 2:
                tap = jnp.where(m_right, tap, 0.0)
            acc = acc + jnp.dot(wtap_ref[kh * 3 + kw], tap,
                                preferred_element_type=jnp.float32)
    t = jnp.maximum(acc + bconv_ref[...], 0.0) + iden        # ReLU + residual

    # ---- CALayer: tiny projections on the VPU/XLU (no M=1 MXU matmuls) -------
    pooled = jnp.mean(t, axis=1, keepdims=True)                        # (C, 1)
    h1 = jnp.maximum(
        jnp.sum(wc1_ref[...] * pooled, axis=0, keepdims=True)
        + bc1_ref[...], 0.0)                                           # (1, C/8)
    scale = jax.nn.sigmoid(
        jnp.sum(wc2_ref[...] * h1, axis=1, keepdims=True)
        + bc2_ref[...])                                                # (C, 1)
    y = t * scale

    # ---- PALayer --------------------------------------------------------------
    # first projection: (C/8, C) @ (C, HW) -> lane-dense N=HW on the MXU (f32)
    h2 = jnp.maximum(
        jnp.dot(wp1_ref[...], y, preferred_element_type=jnp.float32)
        + bp1_ref[...], 0.0)                                           # (C/8, HW)
    # second projection (K=C/8, N=1) as VPU multiply + sublane reduce
    pmask = jax.nn.sigmoid(
        jnp.sum(h2 * wp2_ref[...], axis=0, keepdims=True)
        + bp2_ref[...])                                                # (1, HW)
    y = y * pmask

    out_ref[0] = (y + iden).astype(jnp.bfloat16)             # dense 256-lane store


def _full_spec(a):
    nd = a.ndim
    return pl.BlockSpec(a.shape, lambda n, _nd=nd: (0,) * _nd)


def mkra_forward(x_nchw, kparams):
    """x_nchw: (N, C, H, W), ideally bf16 (bf16 activation pipeline)."""
    N, C, H, W = x_nchw.shape
    HW = H * W
    x2 = x_nchw.reshape(N, C, HW)          # free, row-major
    (wtap, bconv, wc1t, bc1, wc2, bc2, wp1, bp1, wp2, bp2) = kparams

    kernel = functools.partial(mkra_kernel, H=H, W=W, C=C)
    out = pl.pallas_call(
        kernel,
        out_shape=jax.ShapeDtypeStruct((N, C, HW), jnp.bfloat16),
        grid_spec=pltpu.PrefetchScalarGridSpec(
            num_scalar_prefetch=0,
            grid=(N,),
            in_specs=[pl.BlockSpec((1, C, HW), lambda n: (n, 0, 0))] +
                     [_full_spec(a) for a in (wtap, bconv, wc1t, bc1,
                                              wc2, bc2, wp1, bp1, wp2, bp2)],
            out_specs=pl.BlockSpec((1, C, HW), lambda n: (n, 0, 0)),
        ),
        compiler_params=pltpu.CompilerParams(dimension_semantics=("parallel",)),
    )(x2, wtap, bconv, wc1t, bc1, wc2, bc2, wp1, bp1, wp2, bp2)
    return out.reshape(N, C, H, W)


# ---------------------------------------------------------------------------
# deterministic parameter init (PyTorch-default-style uniform, torch layouts)
# ---------------------------------------------------------------------------
def init_params(key, C):
    C4, C8 = C // 4, C // 8
    ks = jax.random.split(key, 16)

    def u(k, shape, fan_in):
        b = 1.0 / np.sqrt(fan_in)
        return jax.random.uniform(k, shape, jnp.float32, -b, b)

    # torch-layout params (Conv2d: OIHW weights, (out,) biases)
    w33 = u(ks[0], (C4, C, 3, 3), C * 9);   b33 = u(ks[1], (C4,), C * 9)
    w13 = u(ks[2], (C4, C, 1, 3), C * 3);   b13 = u(ks[3], (C4,), C * 3)
    w31 = u(ks[4], (C4, C, 3, 1), C * 3);   b31 = u(ks[5], (C4,), C * 3)
    w11 = u(ks[6], (C4, C, 1, 1), C * 1);   b11 = u(ks[7], (C4,), C * 1)
    wc1 = u(ks[8], (C8, C), C);    bc1 = u(ks[9], (C8,), C)
    wc2 = u(ks[10], (C, C8), C8);  bc2 = u(ks[11], (C,), C8)
    wp1 = u(ks[12], (C8, C), C);   bp1 = u(ks[13], (C8,), C)
    wp2 = u(ks[14], (1, C8), C8);  bp2 = u(ks[15], (1,), C8)
    torch_params = (w33, b33, w13, b13, w31, b31, w11, b11,
                    wc1, bc1, wc2, bc2, wp1, bp1, wp2, bp2)

    # merge the four branches into a single 3x3 conv (OIHW); output-channel
    # order [x33, x13, x31, x11] matches torch.cat along dim=1
    wm = jnp.zeros((C, C, 3, 3), jnp.float32)
    wm = wm.at[0 * C4:1 * C4].set(w33)
    wm = wm.at[1 * C4:2 * C4, :, 1:2, :].set(w13)
    wm = wm.at[2 * C4:3 * C4, :, :, 1:2].set(w31)
    wm = wm.at[3 * C4:4 * C4, :, 1:2, 1:2].set(w11)
    bm = jnp.concatenate([b33, b13, b31, b11])                    # (C,)

    # per-tap (C_out, C_in) matmul weights, tap index k = kh*3 + kw
    wtap = jnp.transpose(wm, (2, 3, 0, 1)).reshape(9, C, C).astype(jnp.bfloat16)

    kparams = (wtap,                    # (9, C, C) bf16, conv MXU weights
               bm.reshape(C, 1),        # (C, 1)   conv bias column
               wc1.T,                   # (C, C8)  CA proj-1 (VPU form)
               bc1.reshape(1, C8),      # (1, C8)
               wc2,                     # (C, C8)  CA proj-2 (VPU form)
               bc2.reshape(C, 1),       # (C, 1)
               wp1,                     # (C8, C)  PA proj-1 (MXU LHS), f32
               bp1.reshape(C8, 1),      # (C8, 1)
               wp2.reshape(C8, 1),      # (C8, 1)  PA proj-2 (VPU form)
               bp2.reshape(1, 1))       # (1, 1)
    return kparams, torch_params


# ---------------------------------------------------------------------------
# pure-JAX reference (separate branch convs via lax.conv, NCHW) for sanity
# ---------------------------------------------------------------------------
def ref_forward(x, tp):
    (w33, b33, w13, b13, w31, b31, w11, b11,
     wc1, bc1, wc2, bc2, wp1, bp1, wp2, bp2) = tp
    hi = jax.lax.Precision.HIGHEST

    def conv(x, w, b, pad):
        y = jax.lax.conv_general_dilated(
            x, w, (1, 1), pad, dimension_numbers=("NCHW", "OIHW", "NCHW"),
            precision=hi)
        return y + b[None, :, None, None]

    iden = x
    x33 = conv(x, w33, b33, ((1, 1), (1, 1)))
    x13 = conv(x, w13, b13, ((0, 0), (1, 1)))
    x31 = conv(x, w31, b31, ((1, 1), (0, 0)))
    x11 = conv(x, w11, b11, ((0, 0), (0, 0)))
    t = jnp.maximum(jnp.concatenate([x33, x13, x31, x11], axis=1), 0.0) + iden

    pooled = jnp.mean(t, axis=(2, 3), keepdims=True)
    h1 = jnp.maximum(jnp.einsum("nchw,dc->ndhw", pooled, wc1, precision=hi)
                     + bc1[None, :, None, None], 0.0)
    scale = jax.nn.sigmoid(jnp.einsum("ndhw,cd->nchw", h1, wc2, precision=hi)
                           + bc2[None, :, None, None])
    y = t * scale

    h2 = jnp.maximum(jnp.einsum("nchw,dc->ndhw", y, wp1, precision=hi)
                     + bp1[None, :, None, None], 0.0)
    pmask = jax.nn.sigmoid(jnp.einsum("ndhw,od->nohw", h2, wp2, precision=hi)
                           + bp2[None, :, None, None])
    return y * pmask + iden


if __name__ == "__main__":
    n_feats = 32          # divisible by 4 (branches) and 8 (attention reduction)
    N, H, W = 2, 16, 16

    key = jax.random.PRNGKey(0)
    kx, kp = jax.random.split(key)
    x = jax.random.normal(kx, (N, n_feats, H, W), jnp.float32)   # NCHW, like torch
    x_bf = x.astype(jnp.bfloat16)   # bf16 activation pipeline feeding the kernel

    kparams, torch_params = init_params(kp, n_feats)

    out = mkra_forward(x_bf, kparams)
    out = jax.block_until_ready(out)

    # reference sees the same bf16-rounded input, in f32 / full precision
    ref = ref_forward(x_bf.astype(jnp.float32), torch_params)
    np.testing.assert_allclose(np.asarray(out, dtype=np.float32), np.asarray(ref),
                               rtol=2e-2, atol=2e-2)   # bf16 conv weights / output

    print("KERNEL_OK")
</pallas_src>

<mosaic_0001>
module attributes {stable_mosaic.version = 11 : i64} {
  func.func @mkra_kernel(%arg0: i32, %arg1: memref<1x32x256xbf16, #tpu.memory_space<vmem>>, %arg2: memref<9x32x32xbf16, #tpu.memory_space<vmem>>, %arg3: memref<32x1xf32, #tpu.memory_space<vmem>>, %arg4: memref<32x4xf32, #tpu.memory_space<vmem>>, %arg5: memref<1x4xf32, #tpu.memory_space<vmem>>, %arg6: memref<32x4xf32, #tpu.memory_space<vmem>>, %arg7: memref<32x1xf32, #tpu.memory_space<vmem>>, %arg8: memref<4x32xf32, #tpu.memory_space<vmem>>, %arg9: memref<4x1xf32, #tpu.memory_space<vmem>>, %arg10: memref<4x1xf32, #tpu.memory_space<vmem>>, %arg11: memref<1x1xf32, #tpu.memory_space<vmem>>, %arg12: memref<1x32x256xbf16, #tpu.memory_space<vmem>>) attributes {dimension_semantics = [#tpu.dimension_semantics<parallel>], iteration_bounds = array<i64: 2>, scalar_prefetch = 0 : i64, scratch_operands = 0 : i64, tpu.core_type = #tpu.core_type<tc>, window_params = [{transform_indices = @transform_0, window_bounds = array<i64: 1, 32, 256>}, {pipeline_mode = #tpu.pipeline_mode<synchronous>, transform_indices = @transform_1, window_bounds = array<i64: 9, 32, 32>}, {pipeline_mode = #tpu.pipeline_mode<synchronous>, transform_indices = @transform_2, window_bounds = array<i64: 32, 1>}, {pipeline_mode = #tpu.pipeline_mode<synchronous>, transform_indices = @transform_3, window_bounds = array<i64: 32, 4>}, {pipeline_mode = #tpu.pipeline_mode<synchronous>, transform_indices = @transform_4, window_bounds = array<i64: 1, 4>}, {pipeline_mode = #tpu.pipeline_mode<synchronous>, transform_indices = @transform_5, window_bounds = array<i64: 32, 4>}, {pipeline_mode = #tpu.pipeline_mode<synchronous>, transform_indices = @transform_6, window_bounds = array<i64: 32, 1>}, {pipeline_mode = #tpu.pipeline_mode<synchronous>, transform_indices = @transform_7, window_bounds = array<i64: 4, 32>}, {pipeline_mode = #tpu.pipeline_mode<synchronous>, transform_indices = @transform_8, window_bounds = array<i64: 4, 1>}, {pipeline_mode = #tpu.pipeline_mode<synchronous>, transform_indices = @transform_9, window_bounds = array<i64: 4, 1>}, {pipeline_mode = #tpu.pipeline_mode<synchronous>, transform_indices = @transform_10, window_bounds = array<i64: 1, 1>}, {transform_indices = @transform_11, window_bounds = array<i64: 1, 32, 256>}]} {
    %c0 = arith.constant 0 : index
    %c0_0 = arith.constant 0 : index
    %c0_1 = arith.constant 0 : index
    %0 = vector.load %arg1[%c0, %c0_0, %c0_1] : memref<1x32x256xbf16, #tpu.memory_space<vmem>>, vector<1x32x256xbf16>
    %1 = vector.shape_cast %0 : vector<1x32x256xbf16> to vector<32x256xbf16>
    %2 = arith.extf %1 : vector<32x256xbf16> to vector<32x256xf32>
    %cst = arith.constant 0.000000e+00 : bf16
    %3 = vector.broadcast %cst : bf16 to vector<32x17xbf16>
    %4 = tpu.concatenate %3, %1, %3 in 1 : vector<32x17xbf16>, vector<32x256xbf16>, vector<32x17xbf16> -> vector<32x290xbf16>
    %5 = tpu.iota {dimensions = array<i32: 1>} : vector<1x256xi32>
    %c16_i32 = arith.constant 16 : i32
    %c0_i32 = arith.constant 0 : i32
    %6 = arith.cmpi eq, %c16_i32, %c0_i32 : i32
    %c1_i32 = arith.constant 1 : i32
    %7 = arith.select %6, %c1_i32, %c16_i32 : i32
    %8 = vector.broadcast %7 : i32 to vector<1x256xi32>
    %9 = arith.remsi %5, %8 : vector<1x256xi32>
    %c0_i32_2 = arith.constant 0 : i32
    %10 = vector.broadcast %c0_i32_2 : i32 to vector<1x256xi32>
    %11 = arith.cmpi ne, %9, %10 : vector<1x256xi32>
    %c0_i32_3 = arith.constant 0 : i32
    %12 = vector.broadcast %c0_i32_3 : i32 to vector<1x256xi32>
    %13 = arith.cmpi slt, %9, %12 : vector<1x256xi32>
    %c0_i32_4 = arith.constant 0 : i32
    %14 = arith.cmpi slt, %7, %c0_i32_4 : i32
    %15 = vector.broadcast %14 : i1 to vector<1x256xi1>
    %16 = vector.broadcast %15 : vector<1x256xi1> to vector<1x256xi1>
    %17 = arith.xori %13, %16 : vector<1x256xi1>
    %18 = arith.andi %17, %11 : vector<1x256xi1>
    %19 = vector.broadcast %7 : i32 to vector<1x256xi32>
    %20 = arith.addi %9, %19 : vector<1x256xi32>
    %21 = arith.select %18, %20, %9 : vector<1x256xi1>, vector<1x256xi32>
    %c1_i32_5 = arith.constant 1 : i32
    %22 = vector.broadcast %c1_i32_5 : i32 to vector<1x256xi32>
    %23 = arith.cmpi sge, %21, %22 : vector<1x256xi32>
    %c14_i32 = arith.constant 14 : i32
    %24 = vector.broadcast %c14_i32 : i32 to vector<1x256xi32>
    %25 = arith.cmpi sle, %21, %24 : vector<1x256xi32>
    %cst_6 = arith.constant 0.000000e+00 : f32
    %26 = vector.broadcast %cst_6 : f32 to vector<32x256xf32>
    %27 = vector.extract_strided_slice %4 {offsets = [0, 0], sizes = [32, 256], strides = [1, 1]} : vector<32x290xbf16> to vector<32x256xbf16>
    %cst_7 = arith.constant 0.000000e+00 : f32
    %28 = arith.truncf %cst_7 : f32 to bf16
    %29 = vector.shape_cast %23 : vector<1x256xi1> to vector<1x256xi1>
    %30 = vector.broadcast %29 : vector<1x256xi1> to vector<32x256xi1>
    %31 = vector.broadcast %28 : bf16 to vector<32x256xbf16>
    %32 = arith.select %30, %27, %31 : vector<32x256xi1>, vector<32x256xbf16>
    %c0_8 = arith.constant 0 : index
    %c0_9 = arith.constant 0 : index
    %c0_10 = arith.constant 0 : index
    %33 = vector.load %arg2[%c0_8, %c0_9, %c0_10] : memref<9x32x32xbf16, #tpu.memory_space<vmem>>, vector<1x32x32xbf16>
    %34 = vector.shape_cast %33 : vector<1x32x32xbf16> to vector<32x32xbf16>
    %cst_11 = arith.constant dense<0.000000e+00> : vector<32x256xf32>
    %35 = tpu.matmul %34, %32, %cst_11 {dimension_numbers = #tpu.dot_dimension_numbers<[1], [0], [0], [1], [0, 0, 1, 1], [], []>} : vector<32x32xbf16>, vector<32x256xbf16>, vector<32x256xf32> -> vector<32x256xf32>
    %36 = arith.addf %26, %35 : vector<32x256xf32>
    %37 = vector.extract_strided_slice %4 {offsets = [0, 1], sizes = [32, 256], strides = [1, 1]} : vector<32x290xbf16> to vector<32x256xbf16>
    %c1 = arith.constant 1 : index
    %c0_12 = arith.constant 0 : index
    %c0_13 = arith.constant 0 : index
    %38 = vector.load %arg2[%c1, %c0_12, %c0_13] : memref<9x32x32xbf16, #tpu.memory_space<vmem>>, vector<1x32x32xbf16>
    %39 = vector.shape_cast %38 : vector<1x32x32xbf16> to vector<32x32xbf16>
    %cst_14 = arith.constant dense<0.000000e+00> : vector<32x256xf32>
    %40 = tpu.matmul %39, %37, %cst_14 {dimension_numbers = #tpu.dot_dimension_numbers<[1], [0], [0], [1], [0, 0, 1, 1], [], []>} : vector<32x32xbf16>, vector<32x256xbf16>, vector<32x256xf32> -> vector<32x256xf32>
    %41 = arith.addf %36, %40 : vector<32x256xf32>
    %42 = vector.extract_strided_slice %4 {offsets = [0, 2], sizes = [32, 256], strides = [1, 1]} : vector<32x290xbf16> to vector<32x256xbf16>
    %cst_15 = arith.constant 0.000000e+00 : f32
    %43 = arith.truncf %cst_15 : f32 to bf16
    %44 = vector.shape_cast %25 : vector<1x256xi1> to vector<1x256xi1>
    %45 = vector.broadcast %44 : vector<1x256xi1> to vector<32x256xi1>
    %46 = vector.broadcast %43 : bf16 to vector<32x256xbf16>
    %47 = arith.select %45, %42, %46 : vector<32x256xi1>, vector<32x256xbf16>
    %c2 = arith.constant 2 : index
    %c0_16 = arith.constant 0 : index
    %c0_17 = arith.constant 0 : index
    %48 = vector.load %arg2[%c2, %c0_16, %c0_17] : memref<9x32x32xbf16, #tpu.memory_space<vmem>>, vector<1x32x32xbf16>
    %49 = vector.shape_cast %48 : vector<1x32x32xbf16> to vector<32x32xbf16>
    %cst_18 = arith.constant dense<0.000000e+00> : vector<32x256xf32>
    %50 = tpu.matmul %49, %47, %cst_18 {dimension_numbers = #tpu.dot_dimension_numbers<[1], [0], [0], [1], [0, 0, 1, 1], [], []>} : vector<32x32xbf16>, vector<32x256xbf16>, vector<32x256xf32> -> vector<32x256xf32>
    %51 = arith.addf %41, %50 : vector<32x256xf32>
    %52 = vector.extract_strided_slice %4 {offsets = [0, 16], sizes = [32, 256], strides = [1, 1]} : vector<32x290xbf16> to vector<32x256xbf16>
    %cst_19 = arith.constant 0.000000e+00 : f32
    %53 = arith.truncf %cst_19 : f32 to bf16
    %54 = vector.shape_cast %23 : vector<1x256xi1> to vector<1x256xi1>
    %55 = vector.broadcast %54 : vector<1x256xi1> to vector<32x256xi1>
    %56 = vector.broadcast %53 : bf16 to vector<32x256xbf16>
    %57 = arith.select %55, %52, %56 : vector<32x256xi1>, vector<32x256xbf16>
    %c3 = arith.constant 3 : index
    %c0_20 = arith.constant 0 : index
    %c0_21 = arith.constant 0 : index
    %58 = vector.load %arg2[%c3, %c0_20, %c0_21] : memref<9x32x32xbf16, #tpu.memory_space<vmem>>, vector<1x32x32xbf16>
    %59 = vector.shape_cast %58 : vector<1x32x32xbf16> to vector<32x32xbf16>
    %cst_22 = arith.constant dense<0.000000e+00> : vector<32x256xf32>
    %60 = tpu.matmul %59, %57, %cst_22 {dimension_numbers = #tpu.dot_dimension_numbers<[1], [0], [0], [1], [0, 0, 1, 1], [], []>} : vector<32x32xbf16>, vector<32x256xbf16>, vector<32x256xf32> -> vector<32x256xf32>
    %61 = arith.addf %51, %60 : vector<32x256xf32>
    %62 = vector.extract_strided_slice %4 {offsets = [0, 17], sizes = [32, 256], strides = [1, 1]} : vector<32x290xbf16> to vector<32x256xbf16>
    %c4 = arith.constant 4 : index
    %c0_23 = arith.constant 0 : index
    %c0_24 = arith.constant 0 : index
    %63 = vector.load %arg2[%c4, %c0_23, %c0_24] : memref<9x32x32xbf16, #tpu.memory_space<vmem>>, vector<1x32x32xbf16>
    %64 = vector.shape_cast %63 : vector<1x32x32xbf16> to vector<32x32xbf16>
    %cst_25 = arith.constant dense<0.000000e+00> : vector<32x256xf32>
    %65 = tpu.matmul %64, %62, %cst_25 {dimension_numbers = #tpu.dot_dimension_numbers<[1], [0], [0], [1], [0, 0, 1, 1], [], []>} : vector<32x32xbf16>, vector<32x256xbf16>, vector<32x256xf32> -> vector<32x256xf32>
    %66 = arith.addf %61, %65 : vector<32x256xf32>
    %67 = vector.extract_strided_slice %4 {offsets = [0, 18], sizes = [32, 256], strides = [1, 1]} : vector<32x290xbf16> to vector<32x256xbf16>
    %cst_26 = arith.constant 0.000000e+00 : f32
    %68 = arith.truncf %cst_26 : f32 to bf16
    %69 = vector.shape_cast %25 : vector<1x256xi1> to vector<1x256xi1>
    %70 = vector.broadcast %69 : vector<1x256xi1> to vector<32x256xi1>
    %71 = vector.broadcast %68 : bf16 to vector<32x256xbf16>
    %72 = arith.select %70, %67, %71 : vector<32x256xi1>, vector<32x256xbf16>
    %c5 = arith.constant 5 : index
    %c0_27 = arith.constant 0 : index
    %c0_28 = arith.constant 0 : index
    %73 = vector.load %arg2[%c5, %c0_27, %c0_28] : memref<9x32x32xbf16, #tpu.memory_space<vmem>>, vector<1x32x32xbf16>
    %74 = vector.shape_cast %73 : vector<1x32x32xbf16> to vector<32x32xbf16>
    %cst_29 = arith.constant dense<0.000000e+00> : vector<32x256xf32>
    %75 = tpu.matmul %74, %72, %cst_29 {dimension_numbers = #tpu.dot_dimension_numbers<[1], [0], [0], [1], [0, 0, 1, 1], [], []>} : vector<32x32xbf16>, vector<32x256xbf16>, vector<32x256xf32> -> vector<32x256xf32>
    %76 = arith.addf %66, %75 : vector<32x256xf32>
    %77 = vector.extract_strided_slice %4 {offsets = [0, 32], sizes = [32, 256], strides = [1, 1]} : vector<32x290xbf16> to vector<32x256xbf16>
    %cst_30 = arith.constant 0.000000e+00 : f32
    %78 = arith.truncf %cst_30 : f32 to bf16
    %79 = vector.shape_cast %23 : vector<1x256xi1> to vector<1x256xi1>
    %80 = vector.broadcast %79 : vector<1x256xi1> to vector<32x256xi1>
    %81 = vector.broadcast %78 : bf16 to vector<32x256xbf16>
    %82 = arith.select %80, %77, %81 : vector<32x256xi1>, vector<32x256xbf16>
    %c6 = arith.constant 6 : index
    %c0_31 = arith.constant 0 : index
    %c0_32 = arith.constant 0 : index
    %83 = vector.load %arg2[%c6, %c0_31, %c0_32] : memref<9x32x32xbf16, #tpu.memory_space<vmem>>, vector<1x32x32xbf16>
    %84 = vector.shape_cast %83 : vector<1x32x32xbf16> to vector<32x32xbf16>
    %cst_33 = arith.constant dense<0.000000e+00> : vector<32x256xf32>
    %85 = tpu.matmul %84, %82, %cst_33 {dimension_numbers = #tpu.dot_dimension_numbers<[1], [0], [0], [1], [0, 0, 1, 1], [], []>} : vector<32x32xbf16>, vector<32x256xbf16>, vector<32x256xf32> -> vector<32x256xf32>
    %86 = arith.addf %76, %85 : vector<32x256xf32>
    %87 = vector.extract_strided_slice %4 {offsets = [0, 33], sizes = [32, 256], strides = [1, 1]} : vector<32x290xbf16> to vector<32x256xbf16>
    %c7 = arith.constant 7 : index
    %c0_34 = arith.constant 0 : index
    %c0_35 = arith.constant 0 : index
    %88 = vector.load %arg2[%c7, %c0_34, %c0_35] : memref<9x32x32xbf16, #tpu.memory_space<vmem>>, vector<1x32x32xbf16>
    %89 = vector.shape_cast %88 : vector<1x32x32xbf16> to vector<32x32xbf16>
    %cst_36 = arith.constant dense<0.000000e+00> : vector<32x256xf32>
    %90 = tpu.matmul %89, %87, %cst_36 {dimension_numbers = #tpu.dot_dimension_numbers<[1], [0], [0], [1], [0, 0, 1, 1], [], []>} : vector<32x32xbf16>, vector<32x256xbf16>, vector<32x256xf32> -> vector<32x256xf32>
    %91 = arith.addf %86, %90 : vector<32x256xf32>
    %92 = vector.extract_strided_slice %4 {offsets = [0, 34], sizes = [32, 256], strides = [1, 1]} : vector<32x290xbf16> to vector<32x256xbf16>
    %cst_37 = arith.constant 0.000000e+00 : f32
    %93 = arith.truncf %cst_37 : f32 to bf16
    %94 = vector.shape_cast %25 : vector<1x256xi1> to vector<1x256xi1>
    %95 = vector.broadcast %94 : vector<1x256xi1> to vector<32x256xi1>
    %96 = vector.broadcast %93 : bf16 to vector<32x256xbf16>
    %97 = arith.select %95, %92, %96 : vector<32x256xi1>, vector<32x256xbf16>
    %c8 = arith.constant 8 : index
    %c0_38 = arith.constant 0 : index
    %c0_39 = arith.constant 0 : index
    %98 = vector.load %arg2[%c8, %c0_38, %c0_39] : memref<9x32x32xbf16, #tpu.memory_space<vmem>>, vector<1x32x32xbf16>
    %99 = vector.shape_cast %98 : vector<1x32x32xbf16> to vector<32x32xbf16>
    %cst_40 = arith.constant dense<0.000000e+00> : vector<32x256xf32>
    %100 = tpu.matmul %99, %97, %cst_40 {dimension_numbers = #tpu.dot_dimension_numbers<[1], [0], [0], [1], [0, 0, 1, 1], [], []>} : vector<32x32xbf16>, vector<32x256xbf16>, vector<32x256xf32> -> vector<32x256xf32>
    %101 = arith.addf %91, %100 : vector<32x256xf32>
    %c0_41 = arith.constant 0 : index
    %c0_42 = arith.constant 0 : index
    %102 = vector.load %arg3[%c0_41, %c0_42] : memref<32x1xf32, #tpu.memory_space<vmem>>, vector<32x1xf32>
    %103 = vector.broadcast %102 : vector<32x1xf32> to vector<32x256xf32>
    %104 = arith.addf %101, %103 : vector<32x256xf32>
    %cst_43 = arith.constant 0.000000e+00 : f32
    %105 = vector.broadcast %cst_43 : f32 to vector<32x256xf32>
    %106 = arith.maximumf %104, %105 : vector<32x256xf32>
    %107 = arith.addf %106, %2 : vector<32x256xf32>
    %cst_44 = arith.constant dense<0.000000e+00> : vector<32xf32>
    %108 = vector.multi_reduction <add>, %107, %cst_44 [1] : vector<32x256xf32> to vector<32xf32>
    %109 = vector.shape_cast %108 : vector<32xf32> to vector<32x1xf32>
    %cst_45 = arith.constant 2.560000e+02 : f32
    %110 = vector.broadcast %cst_45 : f32 to vector<32x1xf32>
    %111 = arith.divf %109, %110 : vector<32x1xf32>
    %c0_46 = arith.constant 0 : index
    %c0_47 = arith.constant 0 : index
    %112 = vector.load %arg4[%c0_46, %c0_47] : memref<32x4xf32, #tpu.memory_space<vmem>>, vector<32x4xf32>
    %113 = vector.broadcast %111 : vector<32x1xf32> to vector<32x4xf32>
    %114 = arith.mulf %112, %113 : vector<32x4xf32>
    %cst_48 = arith.constant dense<0.000000e+00> : vector<4xf32>
    %115 = vector.multi_reduction <add>, %114, %cst_48 [0] : vector<32x4xf32> to vector<4xf32>
    %116 = vector.shape_cast %115 : vector<4xf32> to vector<1x4xf32>
    %c0_49 = arith.constant 0 : index
    %c0_50 = arith.constant 0 : index
    %117 = vector.load %arg5[%c0_49, %c0_50] : memref<1x4xf32, #tpu.memory_space<vmem>>, vector<1x4xf32>
    %118 = arith.addf %116, %117 : vector<1x4xf32>
    %cst_51 = arith.constant 0.000000e+00 : f32
    %119 = vector.broadcast %cst_51 : f32 to vector<1x4xf32>
    %120 = arith.maximumf %118, %119 : vector<1x4xf32>
    %c0_52 = arith.constant 0 : index
    %c0_53 = arith.constant 0 : index
    %121 = vector.load %arg6[%c0_52, %c0_53] : memref<32x4xf32, #tpu.memory_space<vmem>>, vector<32x4xf32>
    %122 = vector.broadcast %120 : vector<1x4xf32> to vector<32x4xf32>
    %123 = arith.mulf %121, %122 : vector<32x4xf32>
    %cst_54 = arith.constant dense<0.000000e+00> : vector<32xf32>
    %124 = vector.multi_reduction <add>, %123, %cst_54 [1] : vector<32x4xf32> to vector<32xf32>
    %125 = vector.shape_cast %124 : vector<32xf32> to vector<32x1xf32>
    %c0_55 = arith.constant 0 : index
    %c0_56 = arith.constant 0 : index
    %126 = vector.load %arg7[%c0_55, %c0_56] : memref<32x1xf32, #tpu.memory_space<vmem>>, vector<32x1xf32>
    %127 = arith.addf %125, %126 : vector<32x1xf32>
    %128 = arith.negf %127 : vector<32x1xf32>
    %129 = math.exp %128 : vector<32x1xf32>
    %cst_57 = arith.constant 1.000000e+00 : f32
    %130 = vector.broadcast %cst_57 : f32 to vector<32x1xf32>
    %131 = arith.addf %130, %129 : vector<32x1xf32>
    %132 = arith.divf %130, %131 : vector<32x1xf32>
    %133 = vector.broadcast %132 : vector<32x1xf32> to vector<32x256xf32>
    %134 = arith.mulf %107, %133 : vector<32x256xf32>
    %c0_58 = arith.constant 0 : index
    %c0_59 = arith.constant 0 : index
    %135 = vector.load %arg8[%c0_58, %c0_59] : memref<4x32xf32, #tpu.memory_space<vmem>>, vector<4x32xf32>
    %cst_60 = arith.constant dense<0.000000e+00> : vector<4x256xf32>
    %136 = tpu.matmul %135, %134, %cst_60 {dimension_numbers = #tpu.dot_dimension_numbers<[1], [0], [0], [1], [0, 0, 1, 1], [], []>} : vector<4x32xf32>, vector<32x256xf32>, vector<4x256xf32> -> vector<4x256xf32>
    %c0_61 = arith.constant 0 : index
    %c0_62 = arith.constant 0 : index
    %137 = vector.load %arg9[%c0_61, %c0_62] : memref<4x1xf32, #tpu.memory_space<vmem>>, vector<4x1xf32>
    %138 = vector.broadcast %137 : vector<4x1xf32> to vector<4x256xf32>
    %139 = arith.addf %136, %138 : vector<4x256xf32>
    %cst_63 = arith.constant 0.000000e+00 : f32
    %140 = vector.broadcast %cst_63 : f32 to vector<4x256xf32>
    %141 = arith.maximumf %139, %140 : vector<4x256xf32>
    %c0_64 = arith.constant 0 : index
    %c0_65 = arith.constant 0 : index
    %142 = vector.load %arg10[%c0_64, %c0_65] : memref<4x1xf32, #tpu.memory_space<vmem>>, vector<4x1xf32>
    %143 = vector.broadcast %142 : vector<4x1xf32> to vector<4x256xf32>
    %144 = arith.mulf %141, %143 : vector<4x256xf32>
    %cst_66 = arith.constant dense<0.000000e+00> : vector<256xf32>
    %145 = vector.multi_reduction <add>, %144, %cst_66 [0] : vector<4x256xf32> to vector<256xf32>
    %146 = vector.shape_cast %145 : vector<256xf32> to vector<1x256xf32>
    %c0_67 = arith.constant 0 : index
    %c0_68 = arith.constant 0 : index
    %147 = vector.load %arg11[%c0_67, %c0_68] : memref<1x1xf32, #tpu.memory_space<vmem>>, vector<1x1xf32>
    %148 = vector.broadcast %147 : vector<1x1xf32> to vector<1x256xf32>
    %149 = arith.addf %146, %148 : vector<1x256xf32>
    %150 = arith.negf %149 : vector<1x256xf32>
    %151 = math.exp %150 : vector<1x256xf32>
    %cst_69 = arith.constant 1.000000e+00 : f32
    %152 = vector.broadcast %cst_69 : f32 to vector<1x256xf32>
    %153 = arith.addf %152, %151 : vector<1x256xf32>
    %154 = arith.divf %152, %153 : vector<1x256xf32>
    %155 = vector.broadcast %154 : vector<1x256xf32> to vector<32x256xf32>
    %156 = arith.mulf %134, %155 : vector<32x256xf32>
    %157 = arith.addf %156, %2 : vector<32x256xf32>
    %158 = arith.truncf %157 : vector<32x256xf32> to vector<32x256xbf16>
    %c0_70 = arith.constant 0 : index
    %c0_71 = arith.constant 0 : index
    %c0_72 = arith.constant 0 : index
    %159 = vector.load %arg12[%c0_70, %c0_71, %c0_72] : memref<1x32x256xbf16, #tpu.memory_space<vmem>>, vector<1x32x256xbf16>
    %160 = vector.shape_cast %159 : vector<1x32x256xbf16> to vector<32x256xbf16>
    %161 = vector.shape_cast %158 : vector<32x256xbf16> to vector<1x32x256xbf16>
    tpu.vector_store %arg12[%c0_70, %c0_71, %c0_72], %161 {strides = array<i32>} : memref<1x32x256xbf16, #tpu.memory_space<vmem>>, vector<1x32x256xbf16>,
    return
  }
  func.func @transform_0(%arg0: i32) -> (i32, i32, i32) {
    %c0_i32 = arith.constant 0 : i32
    %c0_i32_0 = arith.constant 0 : i32
    %c0_i32_1 = arith.constant 0 : i32
    return %arg0, %c0_i32, %c0_i32_0 : i32, i32, i32
  }
  func.func @transform_1(%arg0: i32) -> (i32, i32, i32) {
    %c0_i32 = arith.constant 0 : i32
    %c0_i32_0 = arith.constant 0 : i32
    %c0_i32_1 = arith.constant 0 : i32
    %c0_i32_2 = arith.constant 0 : i32
    return %c0_i32, %c0_i32_0, %c0_i32_1 : i32, i32, i32
  }
  func.func @transform_2(%arg0: i32) -> (i32, i32) {
    %c0_i32 = arith.constant 0 : i32
    %c0_i32_0 = arith.constant 0 : i32
    %c0_i32_1 = arith.constant 0 : i32
    return %c0_i32, %c0_i32_0 : i32, i32
  }
  func.func @transform_3(%arg0: i32) -> (i32, i32) {
    %c0_i32 = arith.constant 0 : i32
    %c0_i32_0 = arith.constant 0 : i32
    %c0_i32_1 = arith.constant 0 : i32
    return %c0_i32, %c0_i32_0 : i32, i32
  }
  func.func @transform_4(%arg0: i32) -> (i32, i32) {
    %c0_i32 = arith.constant 0 : i32
    %c0_i32_0 = arith.constant 0 : i32
    %c0_i32_1 = arith.constant 0 : i32
    return %c0_i32, %c0_i32_0 : i32, i32
  }
  func.func @transform_5(%arg0: i32) -> (i32, i32) {
    %c0_i32 = arith.constant 0 : i32
    %c0_i32_0 = arith.constant 0 : i32
    %c0_i32_1 = arith.constant 0 : i32
    return %c0_i32, %c0_i32_0 : i32, i32
  }
  func.func @transform_6(%arg0: i32) -> (i32, i32) {
    %c0_i32 = arith.constant 0 : i32
    %c0_i32_0 = arith.constant 0 : i32
    %c0_i32_1 = arith.constant 0 : i32
    return %c0_i32, %c0_i32_0 : i32, i32
  }
  func.func @transform_7(%arg0: i32) -> (i32, i32) {
    %c0_i32 = arith.constant 0 : i32
    %c0_i32_0 = arith.constant 0 : i32
    %c0_i32_1 = arith.constant 0 : i32
    return %c0_i32, %c0_i32_0 : i32, i32
  }
  func.func @transform_8(%arg0: i32) -> (i32, i32) {
    %c0_i32 = arith.constant 0 : i32
    %c0_i32_0 = arith.constant 0 : i32
    %c0_i32_1 = arith.constant 0 : i32
    return %c0_i32, %c0_i32_0 : i32, i32
  }
  func.func @transform_9(%arg0: i32) -> (i32, i32) {
    %c0_i32 = arith.constant 0 : i32
    %c0_i32_0 = arith.constant 0 : i32
    %c0_i32_1 = arith.constant 0 : i32
    return %c0_i32, %c0_i32_0 : i32, i32
  }
  func.func @transform_10(%arg0: i32) -> (i32, i32) {
    %c0_i32 = arith.constant 0 : i32
    %c0_i32_0 = arith.constant 0 : i32
    %c0_i32_1 = arith.constant 0 : i32
    return %c0_i32, %c0_i32_0 : i32, i32
  }
  func.func @transform_11(%arg0: i32) -> (i32, i32, i32) {
    %c0_i32 = arith.constant 0 : i32
    %c0_i32_0 = arith.constant 0 : i32
    %c0_i32_1 = arith.constant 0 : i32
    return %arg0, %c0_i32, %c0_i32_0 : i32, i32, i32
  }
}

</mosaic_0001>

<llo_original>
// kernel: tpu_custom_call.1
$region0: #{tpu_custom_call.1}
  #allocation0 [shape = 'u32[]', space=smem, size = 0x4, offset = 0x4, fixed_abs, tag = 'smem constant byte address 0x4 - core index']
  #allocation1 [shape = 'u32[72,128]{1,0:T(1,128)}', space=vmem, size = 0x9000, scoped, tag = 'internal scratch']
  #allocation2 [shape = 'f32[1,1]{1,0:T(1,128)S(1)}', space=vmem, size = 0x200, scoped, tag = 'scoped memory for tpu_custom_call.1']
  %s0 = inlined_call_operand.vmem [shape: bf16[2,32,256], index: 0, kind: input, shape index: {}]
  %s1 = inlined_call_operand.hbm [shape: bf16[9,32,32], index: 1, kind: input, shape index: {}]
  %s2 = inlined_call_operand.vmem [shape: f32[32,1], index: 2, kind: input, shape index: {}]
  %s3 = inlined_call_operand.vmem [shape: f32[32,4], index: 3, kind: input, shape index: {}]
  %s4 = inlined_call_operand.vmem [shape: f32[1,4], index: 4, kind: input, shape index: {}]
  %s5 = inlined_call_operand.vmem [shape: f32[32,4], index: 5, kind: input, shape index: {}]
  %s6 = inlined_call_operand.vmem [shape: f32[32,1], index: 6, kind: input, shape index: {}]
  %s7 = inlined_call_operand.vmem [shape: f32[4,32], index: 7, kind: input, shape index: {}]
  %s8 = inlined_call_operand.vmem [shape: f32[4,1], index: 8, kind: input, shape index: {}]
  %s9 = inlined_call_operand.vmem [shape: f32[4,1], index: 9, kind: input, shape index: {}]
  %s10 = inlined_call_operand.<no memory space> [shape: f32[1,1], index: 10, kind: input, shape index: {}]
  %s11 = inlined_call_operand.hbm [shape: bf16[2,32,256], index: 11, kind: output, shape index: {}]
  %s12 = sld [smem:[#allocation0]]
  $region81: #{tpu_custom_call.1} parent=0
    _
  %s14 = ssub.s32 1, %s12
  %s15 = scalar_select 0, %s14, %s12
  %v16 = vstv %s10
  %17 = vst [vmem:[#allocation2] sm:$0x1] %v16
  $region1: #{tpu_custom_call.1} parent=0
    #allocation3 [shape = 'u8[73728]{0}', space=vmem, size = 0x12000, scoped, tag = 'input window, operand 1, single buffered']
    #allocation4 [shape = 's32[2]{0}', space=sflag, size = 0x8, scoped, tag = 'scoped memory for tpu_custom_call.1']
    #allocation5 [shape = 's32[2]{0}', space=sflag, size = 0x8, scoped, tag = 'scoped memory for tpu_custom_call.1']
    #allocation6 [shape = 'u8[32768]{0}', space=vmem, size = 0x8000, scoped, tag = 'output window, operand 0']
    %18 = vsyncpa [#allocation4], 0
    %19 = vsyncpa [#allocation5], 0
    %s20 = scalar_lea.sflag [#allocation5], 1
    %21 = vsyncpa %s20, 0
    loop: start=0, step=1, limit=4
    $region2: #{tpu_custom_call.1} parent=1 // loop_pre_header
      _
    $region3: #{tpu_custom_call.1} parent=1 // loop_header
      %s23 = sphi 0, %s27
      %p24 = scmp.ge.s32.totalorder %s23, 4
      %s33 = sphi 0, %s35
      %s36 = sphi 0, %s33
      %s37 = sphi 0, %s36
      %s53 = sphi 0, %s37
      %s57 = sphi 0, %s57
      %s59 = sphi 0, %s57
      %s60 = sphi 0, %s59
      %s74 = sphi 0, %s60
      %s78 = sphi 0, %s78
      %s80 = sphi 0, %s78
      %s81 = sphi 0, %s80
      %s95 = sphi 0, %s81
      %s99 = sphi 0, %s99
      %s101 = sphi 0, %s99
      %s102 = sphi 0, %s101
      %s116 = sphi 0, %s102
      %s120 = sphi 0, %s120
      %s122 = sphi 0, %s120
      %s123 = sphi 0, %s122
      %s137 = sphi 0, %s123
      %s141 = sphi 0, %s141
      %s143 = sphi 0, %s141
      %s144 = sphi 0, %s143
      %s158 = sphi 0, %s144
      %s162 = sphi 0, %s162
      %s164 = sphi 0, %s162
      %s165 = sphi 0, %s164
      %s179 = sphi 0, %s165
      %s183 = sphi 0, %s183
      %s185 = sphi 0, %s183
      %s186 = sphi 0, %s185
      %s200 = sphi 0, %s186
      %s204 = sphi 0, %s204
      %s206 = sphi 0, %s204
      %s207 = sphi 0, %s206
      %s221 = sphi 0, %s207
      %s225 = sphi 0, %s225
      %s227 = sphi 0, %s225
      %s228 = sphi 0, %s227
      %s242 = sphi 0, %s228
      %s246 = sphi 0, %s246
      %s248 = sphi 0, %s246
      %s249 = sphi 0, %s248
      %s263 = sphi 0, %s249
      %s269 = sphi 0, %s271
      %s272 = sphi 0, %s269
      %s273 = sphi 0, %s272
      %s289 = sphi 0, %s273
    $region4: #{tpu_custom_call.1} parent=1 // loop_header_branch
      %26 = sbr.rel (%p24) target = $region8
    $region5: #{tpu_custom_call.1} parent=1 // loop_body
      %s28 = ssub.s32 %s23, 1
      %s29 = ssub.s32 %s23, 2
      %s30 = sadd.s32 %s23, 1
      %s31 = ssub.s32 %s23, %s30
      %p32 = scmp.eq.s32.totalorder %s31, 0
      %s34 = sadd.s32 %s33, 1
      %s35 = scalar_select %p32, %s33, %s34
      %p38 = pneg %p32
      %p39 = scmp.eq.s32.totalorder %s23, 1
      %p40 = por %p38, %p39
      %p41 = scmp.ne.s32.totalorder %s33, %s36
      %p42 = scmp.eq.s32.totalorder %s23, 0
      %p43 = por %p41, %p42
      %p44 = scmp.ne.s32.totalorder %s33, %s36
      %p45 = scmp.eq.s32.totalorder %s28, 1
      %p46 = por %p44, %p45
      %p47 = scmp.ne.s32.totalorder %s36, %s37
      %p48 = scmp.eq.s32.totalorder %s28, 0
      %p49 = por %p47, %p48
      %p50 = scmp.ne.s32.totalorder %s36, %s37
      %p51 = scmp.eq.s32.totalorder %s29, 1
      %p52 = por %p50, %p51
      %p54 = scmp.ne.s32.totalorder %s37, %s53
      %p55 = scmp.eq.s32.totalorder %s29, 0
      %p56 = por %p54, %p55
      %s58 = sadd.s32 %s57, 1
      %p61 = scmp.eq.s32.totalorder %s23, 1
      %p62 = scmp.ne.s32.totalorder %s57, %s59
      %p63 = scmp.eq.s32.totalorder %s23, 0
      %p64 = por %p62, %p63
      %p65 = scmp.ne.s32.totalorder %s57, %s59
      %p66 = scmp.eq.s32.totalorder %s28, 1
      %p67 = por %p65, %p66
      %p68 = scmp.ne.s32.totalorder %s59, %s60
      %p69 = scmp.eq.s32.totalorder %s28, 0
      %p70 = por %p68, %p69
      %p71 = scmp.ne.s32.totalorder %s59, %s60
      %p72 = scmp.eq.s32.totalorder %s29, 1
      %p73 = por %p71, %p72
      %p75 = scmp.ne.s32.totalorder %s60, %s74
      %p76 = scmp.eq.s32.totalorder %s29, 0
      %p77 = por %p75, %p76
      %s79 = sadd.s32 %s78, 1
      %p82 = scmp.eq.s32.totalorder %s23, 1
      %p83 = scmp.ne.s32.totalorder %s78, %s80
      %p84 = scmp.eq.s32.totalorder %s23, 0
      %p85 = por %p83, %p84
      %p86 = scmp.ne.s32.totalorder %s78, %s80
      %p87 = scmp.eq.s32.totalorder %s28, 1
      %p88 = por %p86, %p87
      %p89 = scmp.ne.s32.totalorder %s80, %s81
      %p90 = scmp.eq.s32.totalorder %s28, 0
      %p91 = por %p89, %p90
      %p92 = scmp.ne.s32.totalorder %s80, %s81
      %p93 = scmp.eq.s32.totalorder %s29, 1
      %p94 = por %p92, %p93
      %p96 = scmp.ne.s32.totalorder %s81, %s95
      %p97 = scmp.eq.s32.totalorder %s29, 0
      %p98 = por %p96, %p97
      %s100 = sadd.s32 %s99, 1
      %p103 = scmp.eq.s32.totalorder %s23, 1
      %p104 = scmp.ne.s32.totalorder %s99, %s101
      %p105 = scmp.eq.s32.totalorder %s23, 0
      %p106 = por %p104, %p105
      %p107 = scmp.ne.s32.totalorder %s99, %s101
      %p108 = scmp.eq.s32.totalorder %s28, 1
      %p109 = por %p107, %p108
      %p110 = scmp.ne.s32.totalorder %s101, %s102
      %p111 = scmp.eq.s32.totalorder %s28, 0
      %p112 = por %p110, %p111
      %p113 = scmp.ne.s32.totalorder %s101, %s102
      %p114 = scmp.eq.s32.totalorder %s29, 1
      %p115 = por %p113, %p114
      %p117 = scmp.ne.s32.totalorder %s102, %s116
      %p118 = scmp.eq.s32.totalorder %s29, 0
      %p119 = por %p117, %p118
      %s121 = sadd.s32 %s120, 1
      %p124 = scmp.eq.s32.totalorder %s23, 1
      %p125 = scmp.ne.s32.totalorder %s120, %s122
      %p126 = scmp.eq.s32.totalorder %s23, 0
      %p127 = por %p125, %p126
      %p128 = scmp.ne.s32.totalorder %s120, %s122
      %p129 = scmp.eq.s32.totalorder %s28, 1
      %p130 = por %p128, %p129
      %p131 = scmp.ne.s32.totalorder %s122, %s123
      %p132 = scmp.eq.s32.totalorder %s28, 0
      %p133 = por %p131, %p132
      %p134 = scmp.ne.s32.totalorder %s122, %s123
      %p135 = scmp.eq.s32.totalorder %s29, 1
      %p136 = por %p134, %p135
      %p138 = scmp.ne.s32.totalorder %s123, %s137
      %p139 = scmp.eq.s32.totalorder %s29, 0
      %p140 = por %p138, %p139
      %s142 = sadd.s32 %s141, 1
      %p145 = scmp.eq.s32.totalorder %s23, 1
      %p146 = scmp.ne.s32.totalorder %s141, %s143
      %p147 = scmp.eq.s32.totalorder %s23, 0
      %p148 = por %p146, %p147
      %p149 = scmp.ne.s32.totalorder %s141, %s143
      %p150 = scmp.eq.s32.totalorder %s28, 1
      %p151 = por %p149, %p150
      %p152 = scmp.ne.s32.totalorder %s143, %s144
      %p153 = scmp.eq.s32.totalorder %s28, 0
      %p154 = por %p152, %p153
      %p155 = scmp.ne.s32.totalorder %s143, %s144
      %p156 = scmp.eq.s32.totalorder %s29, 1
      %p157 = por %p155, %p156
      %p159 = scmp.ne.s32.totalorder %s144, %s158
      %p160 = scmp.eq.s32.totalorder %s29, 0
      %p161 = por %p159, %p160
      %s163 = sadd.s32 %s162, 1
      %p166 = scmp.eq.s32.totalorder %s23, 1
      %p167 = scmp.ne.s32.totalorder %s162, %s164
      %p168 = scmp.eq.s32.totalorder %s23, 0
      %p169 = por %p167, %p168
      %p170 = scmp.ne.s32.totalorder %s162, %s164
      %p171 = scmp.eq.s32.totalorder %s28, 1
      %p172 = por %p170, %p171
      %p173 = scmp.ne.s32.totalorder %s164, %s165
      %p174 = scmp.eq.s32.totalorder %s28, 0
      %p175 = por %p173, %p174
      %p176 = scmp.ne.s32.totalorder %s164, %s165
      %p177 = scmp.eq.s32.totalorder %s29, 1
      %p178 = por %p176, %p177
      %p180 = scmp.ne.s32.totalorder %s165, %s179
      %p181 = scmp.eq.s32.totalorder %s29, 0
      %p182 = por %p180, %p181
      %s184 = sadd.s32 %s183, 1
      %p187 = scmp.eq.s32.totalorder %s23, 1
      %p188 = scmp.ne.s32.totalorder %s183, %s185
      %p189 = scmp.eq.s32.totalorder %s23, 0
      %p190 = por %p188, %p189
      %p191 = scmp.ne.s32.totalorder %s183, %s185
      %p192 = scmp.eq.s32.totalorder %s28, 1
      %p193 = por %p191, %p192
      %p194 = scmp.ne.s32.totalorder %s185, %s186
      %p195 = scmp.eq.s32.totalorder %s28, 0
      %p196 = por %p194, %p195
      %p197 = scmp.ne.s32.totalorder %s185, %s186
      %p198 = scmp.eq.s32.totalorder %s29, 1
      %p199 = por %p197, %p198
      %p201 = scmp.ne.s32.totalorder %s186, %s200
      %p202 = scmp.eq.s32.totalorder %s29, 0
      %p203 = por %p201, %p202
      %s205 = sadd.s32 %s204, 1
      %p208 = scmp.eq.s32.totalorder %s23, 1
      %p209 = scmp.ne.s32.totalorder %s204, %s206
      %p210 = scmp.eq.s32.totalorder %s23, 0
      %p211 = por %p209, %p210
      %p212 = scmp.ne.s32.totalorder %s204, %s206
      %p213 = scmp.eq.s32.totalorder %s28, 1
      %p214 = por %p212, %p213
      %p215 = scmp.ne.s32.totalorder %s206, %s207
      %p216 = scmp.eq.s32.totalorder %s28, 0
      %p217 = por %p215, %p216
      %p218 = scmp.ne.s32.totalorder %s206, %s207
      %p219 = scmp.eq.s32.totalorder %s29, 1
      %p220 = por %p218, %p219
      %p222 = scmp.ne.s32.totalorder %s207, %s221
      %p223 = scmp.eq.s32.totalorder %s29, 0
      %p224 = por %p222, %p223
      %s226 = sadd.s32 %s225, 1
      %p229 = scmp.eq.s32.totalorder %s23, 1
      %p230 = scmp.ne.s32.totalorder %s225, %s227
      %p231 = scmp.eq.s32.totalorder %s23, 0
      %p232 = por %p230, %p231
      %p233 = scmp.ne.s32.totalorder %s225, %s227
      %p234 = scmp.eq.s32.totalorder %s28, 1
      %p235 = por %p233, %p234
      %p236 = scmp.ne.s32.totalorder %s227, %s228
      %p237 = scmp.eq.s32.totalorder %s28, 0
      %p238 = por %p236, %p237
      %p239 = scmp.ne.s32.totalorder %s227, %s228
      %p240 = scmp.eq.s32.totalorder %s29, 1
      %p241 = por %p239, %p240
      %p243 = scmp.ne.s32.totalorder %s228, %s242
      %p244 = scmp.eq.s32.totalorder %s29, 0
      %p245 = por %p243, %p244
      %s247 = sadd.s32 %s246, 1
      %p250 = scmp.eq.s32.totalorder %s23, 1
      %p251 = scmp.ne.s32.totalorder %s246, %s248
      %p252 = scmp.eq.s32.totalorder %s23, 0
      %p253 = por %p251, %p252
      %p254 = scmp.ne.s32.totalorder %s246, %s248
      %p255 = scmp.eq.s32.totalorder %s28, 1
      %p256 = por %p254, %p255
      %p257 = scmp.ne.s32.totalorder %s248, %s249
      %p258 = scmp.eq.s32.totalorder %s28, 0
      %p259 = por %p257, %p258
      %p260 = scmp.ne.s32.totalorder %s248, %s249
      %p261 = scmp.eq.s32.totalorder %s29, 1
      %p262 = por %p260, %p261
      %p264 = scmp.ne.s32.totalorder %s249, %s263
      %p265 = scmp.eq.s32.totalorder %s29, 0
      %p266 = por %p264, %p265
      %s267 = ssub.s32 %s23, %s30
      %p268 = scmp.eq.s32.totalorder %s267, 0
      %s270 = sadd.s32 %s269, 1
      %s271 = scalar_select %p268, %s269, %s270
      %p274 = pneg %p268
      %p275 = scmp.eq.s32.totalorder %s23, 1
      %p276 = por %p274, %p275
      %p277 = scmp.ne.s32.totalorder %s269, %s272
      %p278 = scmp.eq.s32.totalorder %s23, 0
      %p279 = por %p277, %p278
      %p280 = scmp.ne.s32.totalorder %s269, %s272
      %p281 = scmp.eq.s32.totalorder %s28, 1
      %p282 = por %p280, %p281
      %p283 = scmp.ne.s32.totalorder %s272, %s273
      %p284 = scmp.eq.s32.totalorder %s28, 0
      %p285 = por %p283, %p284
      %p286 = scmp.ne.s32.totalorder %s272, %s273
      %p287 = scmp.eq.s32.totalorder %s29, 1
      %p288 = por %p286, %p287
      %p290 = scmp.ne.s32.totalorder %s273, %s289
      %p291 = scmp.eq.s32.totalorder %s29, 0
      %p292 = por %p290, %p291
      %p293 = scmp.le.s32.totalorder 1, %s23
      %p294 = scmp.lt.s32.totalorder %s23, 3
      %p295 = pnand %p293, %p294
      %p296 = pneg %p295
      // Predicated region
      $region9: #{tpu_custom_call.1} parent=5 // pred_check
        _
      $region10: #{tpu_custom_call.1} parent=5 // pred_check_branch
        %298 = sbr.rel (%p295) target = $region12
      $region11: #{tpu_custom_call.1} parent=5 // pred_region
        %s299 = ssub.s32 %s23, 1
        // Predicated region
        $region13: #{tpu_custom_call.1} parent=11 // pred_check
          %p300 = pneg %p70
        $region14: #{tpu_custom_call.1} parent=11 // pred_check_branch
          %302 = sbr.rel (%p300) target = $region16
        $region15: #{tpu_custom_call.1} parent=11 // pred_region
          %304 = vsyncadd [#allocation4], 0
          %s305 = sshll.u32 %s1, 4
          %s306 = int_to_ptr.hbm [resolvable:$true] %s305
          %s307 = sshll.u32 [#allocation3], 4
          %s308 = int_to_ptr.vmem [resolvable:$true] %s307
          %313 = dma.hbm_to_vmem [thread:$0]  %s306, 2304, %s308, [#allocation4], 64, 64, 4
        $region16: #{tpu_custom_call.1} parent=11 // pred_fallthru
          _
        // Predicated region
        $region17: #{tpu_custom_call.1} parent=11 // pred_check
          %p314 = pneg %p91
        $region18: #{tpu_custom_call.1} parent=11 // pred_check_branch
          %316 = sbr.rel (%p314) target = $region20
        $region19: #{tpu_custom_call.1} parent=11 // pred_region
          _
        $region20: #{tpu_custom_call.1} parent=11 // pred_fallthru
          _
        // Predicated region
        $region21: #{tpu_custom_call.1} parent=11 // pred_check
          %p317 = pneg %p112
        $region22: #{tpu_custom_call.1} parent=11 // pred_check_branch
          %319 = sbr.rel (%p317) target = $region24
        $region23: #{tpu_custom_call.1} parent=11 // pred_region
          _
        $region24: #{tpu_custom_call.1} parent=11 // pred_fallthru
          _
        // Predicated region
        $region25: #{tpu_custom_call.1} parent=11 // pred_check
          %p320 = pneg %p133
        $region26: #{tpu_custom_call.1} parent=11 // pred_check_branch
          %322 = sbr.rel (%p320) target = $region28
        $region27: #{tpu_custom_call.1} parent=11 // pred_region
          _
        $region28: #{tpu_custom_call.1} parent=11 // pred_fallthru
          _
        // Predicated region
        $region29: #{tpu_custom_call.1} parent=11 // pred_check
          %p323 = pneg %p154
        $region30: #{tpu_custom_call.1} parent=11 // pred_check_branch
          %325 = sbr.rel (%p323) target = $region32
        $region31: #{tpu_custom_call.1} parent=11 // pred_region
          _
        $region32: #{tpu_custom_call.1} parent=11 // pred_fallthru
          _
        // Predicated region
        $region33: #{tpu_custom_call.1} parent=11 // pred_check
          %p326 = pneg %p175
        $region34: #{tpu_custom_call.1} parent=11 // pred_check_branch
          %328 = sbr.rel (%p326) target = $region36
        $region35: #{tpu_custom_call.1} parent=11 // pred_region
          _
        $region36: #{tpu_custom_call.1} parent=11 // pred_fallthru
          _
        // Predicated region
        $region37: #{tpu_custom_call.1} parent=11 // pred_check
          %p329 = pneg %p196
        $region38: #{tpu_custom_call.1} parent=11 // pred_check_branch
          %331 = sbr.rel (%p329) target = $region40
        $region39: #{tpu_custom_call.1} parent=11 // pred_region
          _
        $region40: #{tpu_custom_call.1} parent=11 // pred_fallthru
          _
        // Predicated region
        $region41: #{tpu_custom_call.1} parent=11 // pred_check
          %p332 = pneg %p217
        $region42: #{tpu_custom_call.1} parent=11 // pred_check_branch
          %334 = sbr.rel (%p332) target = $region44
        $region43: #{tpu_custom_call.1} parent=11 // pred_region
          _
        $region44: #{tpu_custom_call.1} parent=11 // pred_fallthru
          _
        // Predicated region
        $region45: #{tpu_custom_call.1} parent=11 // pred_check
          %p335 = pneg %p238
        $region46: #{tpu_custom_call.1} parent=11 // pred_check_branch
          %337 = sbr.rel (%p335) target = $region48
        $region47: #{tpu_custom_call.1} parent=11 // pred_region
          _
        $region48: #{tpu_custom_call.1} parent=11 // pred_fallthru
          _
        // Predicated region
        $region49: #{tpu_custom_call.1} parent=11 // pred_check
          %p338 = pneg %p259
        $region50: #{tpu_custom_call.1} parent=11 // pred_check_branch
          %340 = sbr.rel (%p338) target = $region52
        $region51: #{tpu_custom_call.1} parent=11 // pred_region
          _
        $region52: #{tpu_custom_call.1} parent=11 // pred_fallthru
          _
      $region12: #{tpu_custom_call.1} parent=5 // pred_fallthru
        _
      %p341 = scmp.lt.s32.totalorder %s23, 2
      // Predicated region
      $region53: #{tpu_custom_call.1} parent=5 // pred_check
        %p342 = pneg %p341
      $region54: #{tpu_custom_call.1} parent=5 // pred_check_branch
        %344 = sbr.rel (%p342) target = $region56
      $region55: #{tpu_custom_call.1} parent=5 // pred_region
        // Predicated region
        $region57: #{tpu_custom_call.1} parent=55 // pred_check
          %p345 = pneg %p43
        $region58: #{tpu_custom_call.1} parent=55 // pred_check_branch
          %347 = sbr.rel (%p345) target = $region60
        $region59: #{tpu_custom_call.1} parent=55 // pred_region
          %p348 = scmp.lt.s32.totalorder %s23, 1
          %s349 = scalar_select %p348, %s23, 1
          %s350 = smul.addr %s349, 8
          %s351 = smul.addr %s350, 4
          %s352 = scalar_lea.vmem %s0, %s351
        $region60: #{tpu_custom_call.1} parent=55 // pred_fallthru
          _
      $region56: #{tpu_custom_call.1} parent=5 // pred_fallthru
        _
      %p353 = scmp.le.s32.totalorder 1, %s23
      %p354 = scmp.lt.s32.totalorder %s23, 3
      %p355 = pnand %p353, %p354
      %p356 = pneg %p355
      // Predicated region
      $region61: #{tpu_custom_call.1} parent=5 // pred_check
        _
      $region62: #{tpu_custom_call.1} parent=5 // pred_check_branch
        %358 = sbr.rel (%p355) target = $region64
      $region63: #{tpu_custom_call.1} parent=5 // pred_region
        %s359 = ssub.s32 %s23, 1
        // Predicated region
        $region65: #{tpu_custom_call.1} parent=63 // pred_check
          %p360 = pneg %p70
        $region66: #{tpu_custom_call.1} parent=63 // pred_check_branch
          %362 = sbr.rel (%p360) target = $region68
        $region67: #{tpu_custom_call.1} parent=63 // pred_region
          %364 = dma.done [#allocation4], 2304
        $region68: #{tpu_custom_call.1} parent=63 // pred_fallthru
          _
        %p365 = scmp.lt.s32.totalorder %s28, 1
        %s366 = scalar_select %p365, %s28, 1
        %s367 = smul.addr %s366, 8
        %s368 = smul.addr %s367, 4
        %s369 = scalar_lea.vmem %s0, %s368
        %p370 = pneg %p49
        %p371 = pneg %p46
        %p372 = pneg %p70
        %p373 = pneg %p67
        %p374 = pneg %p91
        %p375 = pneg %p88
        %p376 = pneg %p112
        %p377 = pneg %p109
        %p378 = pneg %p133
        %p379 = pneg %p130
        %p380 = pneg %p154
        %p381 = pneg %p151
        %p382 = pneg %p175
        %p383 = pneg %p172
        %p384 = pneg %p196
        %p385 = pneg %p193
        %p386 = pneg %p217
        %p387 = pneg %p214
        %p388 = pneg %p238
        %p389 = pneg %p235
        %p390 = pneg %p259
        %p391 = pneg %p256
        %p392 = pneg %p285
        %p393 = pneg %p282
        %s394 = sand.u32 %s272, 1
        %s395 = scalar_lea.sflag [#allocation5], %s394
        %s396 = sand.u32 %s272, 1
        %s397 = smul.addr %s396, 32
        %s398 = scalar_lea.vmem [#allocation6], %s397
        %p399 = scmp.lt.s32.totalorder %s28, 1
        %s400 = scalar_select %p399, %s28, 1
        %s401 = smul.addr %s400, 8
        %s402 = smul.addr %s401, 4
        %s403 = scalar_lea.vmem %s0, %s402
        %v407 = vld [vmem:[%s403] sm:$0xff]
        %v408 = vld [vmem:[%s403 + $0x8] sm:$0xff]
        %v409 = vld [vmem:[%s403 + $0x10] sm:$0xff]
        %v410 = vld [vmem:[%s403 + $0x18] sm:$0xff]
        %v411 = vunpack.c.l.bf16 %v407
        %v412 = vunpack.c.h.bf16 %v407
        %v413 = vunpack.c.l.bf16 %v408
        %v414 = vunpack.c.h.bf16 %v408
        %v415 = vunpack.c.l.bf16 %v409
        %v416 = vunpack.c.h.bf16 %v409
        %v417 = vunpack.c.l.bf16 %v410
        %v418 = vunpack.c.h.bf16 %v410
        %v423 = vunpack.c.l.b16 %v407
        %v424 = vunpack.c.h.b16 %v407
        %v425 = vunpack.c.l.b16 %v408
        %v426 = vunpack.c.h.b16 %v408
        %v427 = vunpack.c.l.b16 %v409
        %v428 = vunpack.c.h.b16 %v409
        %v429 = vunpack.c.l.b16 %v410
        %v430 = vunpack.c.h.b16 %v410
        %v431 = vpack.c.b16 %v425, %v423
        %v432 = vpack.c.b16 %v426, %v424
        %v433 = vpack.c.b16 %v429, %v427
        %v434 = vpack.c.b16 %v430, %v428
        %435 = vrot.lane.b32.xlu0 %v431, 17
        %v436 = vpop.permute.xlu0 %435
        %437 = vrot.lane.b32.xlu0 %v432, 17
        %v438 = vpop.permute.xlu0 %437
        %439 = vrot.lane.b32.xlu0 %v433, 17
        %v440 = vpop.permute.xlu0 %439
        %441 = vrot.lane.b32.xlu0 %v434, 17
        %v442 = vpop.permute.xlu0 %441
        %vm443 = vcmask 138240
        %v444 = vsel %vm443, %v436, %v438
        %v445 = vsel %vm443, %v440, %v442
        %vm448 = vcmask 138240
        %v451 = vsel %vm448, 0, %v436
        %v454 = vsel %vm448, 0, %v440
        %v457 = vsel %vm448, %v438, 0
        %v460 = vsel %vm448, %v442, 0
        %v462 = vlaneseq
        %v463 = vand.u32 %v462, 127
        %v464 = vadd.s32 %v463, 128
        %vm465 = vcmp.lt.s32.totalorder %v463, 0
        %v466 = vsub.s32 0, %v463
        %v467 = vsel %vm465, %v466, %v463
        %v468 = vshrl.u32 %v467, 4
        %v469 = vand.u32 %v467, 15
        %v470 = vsub.s32 0, %v469
        %v471 = vsel %vm465, %v470, %v469
        %vm472 = vcmp.lt.s32.totalorder %v464, 0
        %v473 = vsub.s32 0, %v464
        %v474 = vsel %vm472, %v473, %v464
        %v475 = vshrl.u32 %v474, 4
        %v476 = vand.u32 %v474, 15
        %v477 = vsub.s32 0, %v476
        %v478 = vsel %vm472, %v477, %v476
        %vm479 = vcmp.ne.s32.totalorder %v471, 0
        %vm480 = vcmp.ne.s32.totalorder %v478, 0
        %vm481 = vcmp.lt.s32.totalorder %v471, 0
        %vm482 = vcmp.lt.s32.totalorder %v478, 0
        %vm483 = vmand %vm481, %vm479
        %vm484 = vmand %vm482, %vm480
        %v485 = vadd.s32 %v471, 16
        %v486 = vadd.s32 %v478, 16
        %v487 = vsel %vm483, %v485, %v471
        %v488 = vsel %vm484, %v486, %v478
        %vm489 = vcmp.ge.s32.totalorder %v487, 1
        %vm490 = vcmp.ge.s32.totalorder %v488, 1
        %vm491 = vcmp.le.s32.totalorder %v487, 14
        %vm492 = vcmp.le.s32.totalorder %v488, 14
        %v493 = vsel %vm489, 1, 0
        %v494 = vsel %vm490, 1, 0
        %vm495 = vcmp.eq.s32.totalorder %v493, 1
        %vm496 = vcmp.eq.s32.totalorder %v494, 1
        %vm497 = vmpackc.low %vm496, %vm495
        %v498 = vsel %vm497, 65537, 0
        %v499 = vperm.slane %v498, 0
        %v500 = vperm.slane %v498, 4
        %v501 = vunpack.c.l.b16 %v499
        %v502 = vunpack.c.h.b16 %v499
        %v503 = vunpack.c.l.b16 0
        %v504 = vunpack.c.h.b16 0
        %vm505 = vcmp.ne.s32.totalorder %v501, %v503
        %vm506 = vcmp.ne.s32.totalorder %v502, %v504
        %vm507 = vmpackc.low %vm506, %vm505
        %v508 = vunpack.c.l.b16 %v500
        %v509 = vunpack.c.h.b16 %v500
        %v510 = vunpack.c.l.b16 0
        %v511 = vunpack.c.h.b16 0
        %vm512 = vcmp.ne.s32.totalorder %v508, %v510
        %vm513 = vcmp.ne.s32.totalorder %v509, %v511
        %vm514 = vmpackc.low %vm513, %vm512
        %v515 = vsel %vm507, %v451, 0
        %v516 = vsel %vm514, %v444, 0
        %v517 = vsel %vm507, %v454, 0
        %v518 = vsel %vm514, %v445, 0
        %v519 = vld [vmem:[#allocation3] sm:$0xf]
        %v520 = vld [vmem:[#allocation3 + $0x4] sm:$0xf]
        %v521 = vld [vmem:[#allocation3 + $0x8] sm:$0xf]
        %v522 = vld [vmem:[#allocation3 + $0xc] sm:$0xf]
        %s523 = scalar_lea.vmem [#allocation3], 16
        %v524 = vld [vmem:[%s523] sm:$0xf]
        %v525 = vld [vmem:[%s523 + $0x4] sm:$0xf]
        %v526 = vld [vmem:[%s523 + $0x8] sm:$0xf]
        %v527 = vld [vmem:[%s523 + $0xc] sm:$0xf]
        %v532 = vunpack.c.l.b16 %v524
        %v533 = vunpack.c.l.b16 %v525
        %v534 = vunpack.c.l.b16 %v526
        %v535 = vunpack.c.l.b16 %v527
        %v536 = vpack.c.b16 %v533, %v532
        %v537 = vpack.c.b16 %v535, %v534
        %542 = vrot.lane.b32.xlu0 %v451, 127
        %v543 = vpop.permute.xlu0 %542
        %544 = vrot.lane.b32.xlu0 %v444, 127
        %v545 = vpop.permute.xlu0 %544
        %546 = vrot.lane.b32.xlu0 %v457, 127
        %v547 = vpop.permute.xlu0 %546
        %548 = vrot.lane.b32.xlu0 %v454, 127
        %v549 = vpop.permute.xlu0 %548
        %550 = vrot.lane.b32.xlu0 %v445, 127
        %v551 = vpop.permute.xlu0 %550
        %552 = vrot.lane.b32.xlu0 %v460, 127
        %v553 = vpop.permute.xlu0 %552
        %vm554 = vcmask 1039360
        %v555 = vsel %vm554, %v543, %v545
        %v556 = vsel %vm554, %v545, %v547
        %v557 = vsel %vm554, %v549, %v551
        %v558 = vsel %vm554, %v551, %v553
        %vm563 = vcmask 261120
        %v565 = vsel %vm563, %v536, 0
        %v568 = vsel %vm563, %v537, 0
        %570 = vmatpush.bf16.msra.mxu0 0
        %571 = vmatpush.bf16.msra.mxu0 0
        %572 = vmatpush.bf16.msra.mxu0 0
        %573 = vmatpush.bf16.msra.mxu0 0
        %574 = vmatpush.bf16.msra.mxu0 0
        %575 = vmatpush.bf16.msra.mxu0 0
        %576 = vmatpush.bf16.msra.mxu0 %v557
        %577 = vmatpush.bf16.msra.mxu0 %v555
        %578 = vmatmul.bf16.gmra.mxu0 %v565
        %v579 = vpop.f32.mrf.mxu0
        %v580 = vadd.f32 0.0, %v579
        %v581 = vpop.f32.mrf.mxu0
        %v582 = vadd.f32 0.0, %v581
        %583 = vmatmul.bf16.gmra.mxu0 %v568
        %v584 = vpop.f32.mrf.mxu0
        %v585 = vadd.f32 0.0, %v584
        %v586 = vpop.f32.mrf.mxu0
        %v587 = vadd.f32 0.0, %v586
        %588 = vdwg.mxu0
        %589 = vmatpush.bf16.msra.mxu0 0
        %590 = vmatpush.bf16.msra.mxu0 0
        %591 = vmatpush.bf16.msra.mxu0 0
        %592 = vmatpush.bf16.msra.mxu0 0
        %593 = vmatpush.bf16.msra.mxu0 0
        %594 = vmatpush.bf16.msra.mxu0 0
        %595 = vmatpush.bf16.msra.mxu0 %v558
        %596 = vmatpush.bf16.msra.mxu0 %v556
        %597 = vmatmul.bf16.gmra.mxu0 %v565
        %v598 = vpop.f32.mrf.mxu0
        %v599 = vadd.f32 0.0, %v598
        %v600 = vpop.f32.mrf.mxu0
        %v601 = vadd.f32 0.0, %v600
        %602 = vmatmul.bf16.gmra.mxu0 %v568
        %v603 = vpop.f32.mrf.mxu0
        %v604 = vadd.f32 0.0, %v603
        %v605 = vpop.f32.mrf.mxu0
        %v606 = vadd.f32 0.0, %v605
        %607 = vdwg.mxu0
        %v612 = vunpack.c.l.b16 %v519
        %v613 = vunpack.c.l.b16 %v520
        %v614 = vunpack.c.l.b16 %v521
        %v615 = vunpack.c.l.b16 %v522
        %v616 = vpack.c.b16 %v613, %v612
        %v617 = vpack.c.b16 %v615, %v614
        %v619 = vsel %vm563, %v616, 0
        %v622 = vsel %vm563, %v617, 0
        %624 = vmatpush.bf16.msra.mxu0 0
        %625 = vmatpush.bf16.msra.mxu0 0
        %626 = vmatpush.bf16.msra.mxu0 0
        %627 = vmatpush.bf16.msra.mxu0 0
        %628 = vmatpush.bf16.msra.mxu0 0
        %629 = vmatpush.bf16.msra.mxu0 0
        %630 = vmatpush.bf16.msra.mxu0 %v517
        %631 = vmatpush.bf16.msra.mxu0 %v515
        %632 = vmatmul.bf16.gmra.mxu0 %v619
        %v633 = vpop.f32.mrf.mxu0
        %v634 = vadd.f32 %v580, %v633
        %v635 = vpop.f32.mrf.mxu0
        %v636 = vadd.f32 %v582, %v635
        %637 = vmatmul.bf16.gmra.mxu0 %v622
        %v638 = vpop.f32.mrf.mxu0
        %v639 = vadd.f32 %v585, %v638
        %v640 = vpop.f32.mrf.mxu0
        %v641 = vadd.f32 %v587, %v640
        %642 = vdwg.mxu0
        %643 = vmatpush.bf16.msra.mxu0 0
        %644 = vmatpush.bf16.msra.mxu0 0
        %645 = vmatpush.bf16.msra.mxu0 0
        %646 = vmatpush.bf16.msra.mxu0 0
        %647 = vmatpush.bf16.msra.mxu0 0
        %648 = vmatpush.bf16.msra.mxu0 0
        %649 = vmatpush.bf16.msra.mxu0 %v518
        %650 = vmatpush.bf16.msra.mxu0 %v516
        %651 = vmatmul.bf16.gmra.mxu0 %v619
        %v652 = vpop.f32.mrf.mxu0
        %v653 = vadd.f32 %v599, %v652
        %v654 = vpop.f32.mrf.mxu0
        %v655 = vadd.f32 %v601, %v654
        %656 = vmatmul.bf16.gmra.mxu0 %v622
        %v657 = vpop.f32.mrf.mxu0
        %v658 = vadd.f32 %v604, %v657
        %v659 = vpop.f32.mrf.mxu0
        %v660 = vadd.f32 %v606, %v659
        %661 = vdwg.mxu0
        %v662 = vsel %vm491, 1, 0
        %v663 = vsel %vm492, 1, 0
        %vm664 = vcmp.eq.s32.totalorder %v662, 1
        %vm665 = vcmp.eq.s32.totalorder %v663, 1
        %vm666 = vmpackc.low %vm665, %vm664
        %v667 = vsel %vm666, 65537, 0
        %v668 = vperm.slane %v667, 0
        %v669 = vperm.slane %v667, 4
        %670 = vrot.lane.b32.xlu0 %v668, 2
        %v671 = vpop.permute.xlu0 %670
        %672 = vrot.lane.b32.xlu0 %v669, 2
        %v673 = vpop.permute.xlu0 %672
        %vm674 = vcmask 15360
        %v675 = vsel %vm674, %v671, %v673
        %v676 = vunpack.c.l.b16 %v671
        %v677 = vunpack.c.h.b16 %v671
        %v678 = vunpack.c.l.b16 0
        %v679 = vunpack.c.h.b16 0
        %vm680 = vcmp.ne.s32.totalorder %v676, %v678
        %vm681 = vcmp.ne.s32.totalorder %v677, %v679
        %vm682 = vmpackc.low %vm681, %vm680
        %v683 = vunpack.c.l.b16 %v675
        %v684 = vunpack.c.h.b16 %v675
        %v685 = vunpack.c.l.b16 0
        %v686 = vunpack.c.h.b16 0
        %vm687 = vcmp.ne.s32.totalorder %v683, %v685
        %vm688 = vcmp.ne.s32.totalorder %v684, %v686
        %vm689 = vmpackc.low %vm688, %vm687
        %v690 = vunpack.c.l.b16 %v673
        %v691 = vunpack.c.h.b16 %v673
        %v692 = vunpack.c.l.b16 0
        %v693 = vunpack.c.h.b16 0
        %vm694 = vcmp.ne.s32.totalorder %v690, %v692
        %vm695 = vcmp.ne.s32.totalorder %v691, %v693
        %vm696 = vmpackc.low %vm695, %vm694
        %v697 = vsel %vm682, %v451, 0
        %v698 = vsel %vm689, %v444, 0
        %v699 = vsel %vm696, %v457, 0
        %v700 = vsel %vm682, %v454, 0
        %v701 = vsel %vm689, %v445, 0
        %v702 = vsel %vm696, %v460, 0
        %s703 = scalar_lea.vmem [#allocation3], 32
        %v704 = vld [vmem:[%s703] sm:$0xf]
        %v705 = vld [vmem:[%s703 + $0x4] sm:$0xf]
        %v706 = vld [vmem:[%s703 + $0x8] sm:$0xf]
        %v707 = vld [vmem:[%s703 + $0xc] sm:$0xf]
        %v712 = vunpack.c.l.b16 %v704
        %v713 = vunpack.c.l.b16 %v705
        %v714 = vunpack.c.l.b16 %v706
        %v715 = vunpack.c.l.b16 %v707
        %v716 = vpack.c.b16 %v713, %v712
        %v717 = vpack.c.b16 %v715, %v714
        %724 = vrot.lane.b32.xlu0 %v697, 126
        %v725 = vpop.permute.xlu0 %724
        %726 = vrot.lane.b32.xlu0 %v698, 126
        %v727 = vpop.permute.xlu0 %726
        %728 = vrot.lane.b32.xlu0 %v699, 126
        %v729 = vpop.permute.xlu0 %728
        %730 = vrot.lane.b32.xlu0 %v700, 126
        %v731 = vpop.permute.xlu0 %730
        %732 = vrot.lane.b32.xlu0 %v701, 126
        %v733 = vpop.permute.xlu0 %732
        %734 = vrot.lane.b32.xlu0 %v702, 126
        %v735 = vpop.permute.xlu0 %734
        %vm736 = vcmask 1031168
        %v737 = vsel %vm736, %v725, %v727
        %v738 = vsel %vm736, %v727, %v729
        %v739 = vsel %vm736, %v731, %v733
        %v740 = vsel %vm736, %v733, %v735
        %v746 = vsel %vm563, %v716, 0
        %v749 = vsel %vm563, %v717, 0
        %751 = vmatpush.bf16.msra.mxu0 0
        %752 = vmatpush.bf16.msra.mxu0 0
        %753 = vmatpush.bf16.msra.mxu0 0
        %754 = vmatpush.bf16.msra.mxu0 0
        %755 = vmatpush.bf16.msra.mxu0 0
        %756 = vmatpush.bf16.msra.mxu0 0
        %757 = vmatpush.bf16.msra.mxu0 %v739
        %758 = vmatpush.bf16.msra.mxu0 %v737
        %759 = vmatmul.bf16.gmra.mxu0 %v746
        %v760 = vpop.f32.mrf.mxu0
        %v761 = vadd.f32 0.0, %v760
        %v762 = vpop.f32.mrf.mxu0
        %v763 = vadd.f32 0.0, %v762
        %764 = vmatmul.bf16.gmra.mxu0 %v749
        %v765 = vpop.f32.mrf.mxu0
        %v766 = vadd.f32 0.0, %v765
        %v767 = vpop.f32.mrf.mxu0
        %v768 = vadd.f32 0.0, %v767
        %769 = vdwg.mxu0
        %770 = vmatpush.bf16.msra.mxu0 0
        %771 = vmatpush.bf16.msra.mxu0 0
        %772 = vmatpush.bf16.msra.mxu0 0
        %773 = vmatpush.bf16.msra.mxu0 0
        %774 = vmatpush.bf16.msra.mxu0 0
        %775 = vmatpush.bf16.msra.mxu0 0
        %776 = vmatpush.bf16.msra.mxu0 %v740
        %777 = vmatpush.bf16.msra.mxu0 %v738
        %778 = vmatmul.bf16.gmra.mxu0 %v746
        %v779 = vpop.f32.mrf.mxu0
        %v780 = vadd.f32 0.0, %v779
        %v781 = vpop.f32.mrf.mxu0
        %v782 = vadd.f32 0.0, %v781
        %783 = vmatmul.bf16.gmra.mxu0 %v749
        %v784 = vpop.f32.mrf.mxu0
        %v785 = vadd.f32 0.0, %v784
        %v786 = vpop.f32.mrf.mxu0
        %v787 = vadd.f32 0.0, %v786
        %788 = vdwg.mxu0
        %v789 = vadd.f32 %v634, %v761
        %v790 = vadd.f32 %v653, %v780
        %v791 = vadd.f32 %v636, %v763
        %v792 = vadd.f32 %v655, %v782
        %v793 = vadd.f32 %v639, %v766
        %v794 = vadd.f32 %v658, %v785
        %v795 = vadd.f32 %v641, %v768
        %v796 = vadd.f32 %v660, %v787
        %797 = vrot.lane.b32.xlu0 %v499, 16
        %v798 = vpop.permute.xlu0 %797
        %799 = vrot.lane.b32.xlu0 %v500, 16
        %v800 = vpop.permute.xlu0 %799
        %vm801 = vcmask 130048
        %v802 = vsel %vm801, %v798, %v800
        %v803 = vunpack.c.l.b16 %v798
        %v804 = vunpack.c.h.b16 %v798
        %v805 = vunpack.c.l.b16 0
        %v806 = vunpack.c.h.b16 0
        %vm807 = vcmp.ne.s32.totalorder %v803, %v805
        %vm808 = vcmp.ne.s32.totalorder %v804, %v806
        %vm809 = vmpackc.low %vm808, %vm807
        %v810 = vunpack.c.l.b16 %v802
        %v811 = vunpack.c.h.b16 %v802
        %v812 = vunpack.c.l.b16 0
        %v813 = vunpack.c.h.b16 0
        %vm814 = vcmp.ne.s32.totalorder %v810, %v812
        %vm815 = vcmp.ne.s32.totalorder %v811, %v813
        %vm816 = vmpackc.low %vm815, %vm814
        %v817 = vunpack.c.l.b16 %v800
        %v818 = vunpack.c.h.b16 %v800
        %v819 = vunpack.c.l.b16 0
        %v820 = vunpack.c.h.b16 0
        %vm821 = vcmp.ne.s32.totalorder %v817, %v819
        %vm822 = vcmp.ne.s32.totalorder %v818, %v820
        %vm823 = vmpackc.low %vm822, %vm821
        %v824 = vsel %vm809, %v451, 0
        %v825 = vsel %vm816, %v444, 0
        %v826 = vsel %vm823, %v457, 0
        %v827 = vsel %vm809, %v454, 0
        %v828 = vsel %vm816, %v445, 0
        %v829 = vsel %vm823, %v460, 0
        %s830 = scalar_lea.vmem [#allocation3], 48
        %v831 = vld [vmem:[%s830] sm:$0xf]
        %v832 = vld [vmem:[%s830 + $0x4] sm:$0xf]
        %v833 = vld [vmem:[%s830 + $0x8] sm:$0xf]
        %v834 = vld [vmem:[%s830 + $0xc] sm:$0xf]
        %v839 = vunpack.c.l.b16 %v831
        %v840 = vunpack.c.l.b16 %v832
        %v841 = vunpack.c.l.b16 %v833
        %v842 = vunpack.c.l.b16 %v834
        %v843 = vpack.c.b16 %v840, %v839
        %v844 = vpack.c.b16 %v842, %v841
        %851 = vrot.lane.b32.xlu0 %v824, 112
        %v852 = vpop.permute.xlu0 %851
        %853 = vrot.lane.b32.xlu0 %v825, 112
        %v854 = vpop.permute.xlu0 %853
        %855 = vrot.lane.b32.xlu0 %v826, 112
        %v856 = vpop.permute.xlu0 %855
        %857 = vrot.lane.b32.xlu0 %v827, 112
        %v858 = vpop.permute.xlu0 %857
        %859 = vrot.lane.b32.xlu0 %v828, 112
        %v860 = vpop.permute.xlu0 %859
        %861 = vrot.lane.b32.xlu0 %v829, 112
        %v862 = vpop.permute.xlu0 %861
        %vm863 = vcmask 916480
        %v864 = vsel %vm863, %v852, %v854
        %v865 = vsel %vm863, %v854, %v856
        %v866 = vsel %vm863, %v858, %v860
        %v867 = vsel %vm863, %v860, %v862
        %v873 = vsel %vm563, %v843, 0
        %v876 = vsel %vm563, %v844, 0
        %878 = vmatpush.bf16.msra.mxu0 0
        %879 = vmatpush.bf16.msra.mxu0 0
        %880 = vmatpush.bf16.msra.mxu0 0
        %881 = vmatpush.bf16.msra.mxu0 0
        %882 = vmatpush.bf16.msra.mxu0 0
        %883 = vmatpush.bf16.msra.mxu0 0
        %884 = vmatpush.bf16.msra.mxu0 %v866
        %885 = vmatpush.bf16.msra.mxu0 %v864
        %886 = vmatmul.bf16.gmra.mxu0 %v873
        %v887 = vpop.f32.mrf.mxu0
        %v888 = vadd.f32 0.0, %v887
        %v889 = vpop.f32.mrf.mxu0
        %v890 = vadd.f32 0.0, %v889
        %891 = vmatmul.bf16.gmra.mxu0 %v876
        %v892 = vpop.f32.mrf.mxu0
        %v893 = vadd.f32 0.0, %v892
        %v894 = vpop.f32.mrf.mxu0
        %v895 = vadd.f32 0.0, %v894
        %896 = vdwg.mxu0
        %897 = vmatpush.bf16.msra.mxu0 0
        %898 = vmatpush.bf16.msra.mxu0 0
        %899 = vmatpush.bf16.msra.mxu0 0
        %900 = vmatpush.bf16.msra.mxu0 0
        %901 = vmatpush.bf16.msra.mxu0 0
        %902 = vmatpush.bf16.msra.mxu0 0
        %903 = vmatpush.bf16.msra.mxu0 %v867
        %904 = vmatpush.bf16.msra.mxu0 %v865
        %905 = vmatmul.bf16.gmra.mxu0 %v873
        %v906 = vpop.f32.mrf.mxu0
        %v907 = vadd.f32 0.0, %v906
        %v908 = vpop.f32.mrf.mxu0
        %v909 = vadd.f32 0.0, %v908
        %910 = vmatmul.bf16.gmra.mxu0 %v876
        %v911 = vpop.f32.mrf.mxu0
        %v912 = vadd.f32 0.0, %v911
        %v913 = vpop.f32.mrf.mxu0
        %v914 = vadd.f32 0.0, %v913
        %915 = vdwg.mxu0
        %v916 = vadd.f32 %v789, %v888
        %v917 = vadd.f32 %v790, %v907
        %v918 = vadd.f32 %v791, %v890
        %v919 = vadd.f32 %v792, %v909
        %v920 = vadd.f32 %v793, %v893
        %v921 = vadd.f32 %v794, %v912
        %v922 = vadd.f32 %v795, %v895
        %v923 = vadd.f32 %v796, %v914
        %s924 = scalar_lea.vmem [#allocation3], 64
        %v925 = vld [vmem:[%s924] sm:$0xf]
        %v926 = vld [vmem:[%s924 + $0x4] sm:$0xf]
        %v927 = vld [vmem:[%s924 + $0x8] sm:$0xf]
        %v928 = vld [vmem:[%s924 + $0xc] sm:$0xf]
        %v933 = vunpack.c.l.b16 %v925
        %v934 = vunpack.c.l.b16 %v926
        %v935 = vunpack.c.l.b16 %v927
        %v936 = vunpack.c.l.b16 %v928
        %v937 = vpack.c.b16 %v934, %v933
        %v938 = vpack.c.b16 %v936, %v935
        %939 = vrot.lane.b32.xlu0 %v451, 111
        %v940 = vpop.permute.xlu0 %939
        %941 = vrot.lane.b32.xlu0 %v444, 111
        %v942 = vpop.permute.xlu0 %941
        %943 = vrot.lane.b32.xlu0 %v457, 111
        %v944 = vpop.permute.xlu0 %943
        %945 = vrot.lane.b32.xlu0 %v454, 111
        %v946 = vpop.permute.xlu0 %945
        %947 = vrot.lane.b32.xlu0 %v445, 111
        %v948 = vpop.permute.xlu0 %947
        %949 = vrot.lane.b32.xlu0 %v460, 111
        %v950 = vpop.permute.xlu0 %949
        %vm951 = vcmask 908288
        %v952 = vsel %vm951, %v940, %v942
        %v953 = vsel %vm951, %v942, %v944
        %v954 = vsel %vm951, %v946, %v948
        %v955 = vsel %vm951, %v948, %v950
        %v961 = vsel %vm563, %v937, 0
        %v964 = vsel %vm563, %v938, 0
        %966 = vmatpush.bf16.msra.mxu0 0
        %967 = vmatpush.bf16.msra.mxu0 0
        %968 = vmatpush.bf16.msra.mxu0 0
        %969 = vmatpush.bf16.msra.mxu0 0
        %970 = vmatpush.bf16.msra.mxu0 0
        %971 = vmatpush.bf16.msra.mxu0 0
        %972 = vmatpush.bf16.msra.mxu0 %v954
        %973 = vmatpush.bf16.msra.mxu0 %v952
        %974 = vmatmul.bf16.gmra.mxu0 %v961
        %v975 = vpop.f32.mrf.mxu0
        %v976 = vadd.f32 0.0, %v975
        %v977 = vpop.f32.mrf.mxu0
        %v978 = vadd.f32 0.0, %v977
        %979 = vmatmul.bf16.gmra.mxu0 %v964
        %v980 = vpop.f32.mrf.mxu0
        %v981 = vadd.f32 0.0, %v980
        %v982 = vpop.f32.mrf.mxu0
        %v983 = vadd.f32 0.0, %v982
        %984 = vdwg.mxu0
        %985 = vmatpush.bf16.msra.mxu0 0
        %986 = vmatpush.bf16.msra.mxu0 0
        %987 = vmatpush.bf16.msra.mxu0 0
        %988 = vmatpush.bf16.msra.mxu0 0
        %989 = vmatpush.bf16.msra.mxu0 0
        %990 = vmatpush.bf16.msra.mxu0 0
        %991 = vmatpush.bf16.msra.mxu0 %v955
        %992 = vmatpush.bf16.msra.mxu0 %v953
        %993 = vmatmul.bf16.gmra.mxu0 %v961
        %v994 = vpop.f32.mrf.mxu0
        %v995 = vadd.f32 0.0, %v994
        %v996 = vpop.f32.mrf.mxu0
        %v997 = vadd.f32 0.0, %v996
        %998 = vmatmul.bf16.gmra.mxu0 %v964
        %v999 = vpop.f32.mrf.mxu0
        %v1000 = vadd.f32 0.0, %v999
        %v1001 = vpop.f32.mrf.mxu0
        %v1002 = vadd.f32 0.0, %v1001
        %1003 = vdwg.mxu0
        %v1004 = vadd.f32 %v916, %v976
        %v1005 = vadd.f32 %v917, %v995
        %v1006 = vadd.f32 %v918, %v978
        %v1007 = vadd.f32 %v919, %v997
        %v1008 = vadd.f32 %v920, %v981
        %v1009 = vadd.f32 %v921, %v1000
        %v1010 = vadd.f32 %v922, %v983
        %v1011 = vadd.f32 %v923, %v1002
        %1012 = vrot.lane.b32.xlu0 %v668, 18
        %v1013 = vpop.permute.xlu0 %1012
        %1014 = vrot.lane.b32.xlu0 %v669, 18
        %v1015 = vpop.permute.xlu0 %1014
        %vm1016 = vcmask 146432
        %v1017 = vsel %vm1016, %v1013, %v1015
        %v1018 = vunpack.c.l.b16 %v1013
        %v1019 = vunpack.c.h.b16 %v1013
        %v1020 = vunpack.c.l.b16 0
        %v1021 = vunpack.c.h.b16 0
        %vm1022 = vcmp.ne.s32.totalorder %v1018, %v1020
        %vm1023 = vcmp.ne.s32.totalorder %v1019, %v1021
        %vm1024 = vmpackc.low %vm1023, %vm1022
        %v1025 = vunpack.c.l.b16 %v1017
        %v1026 = vunpack.c.h.b16 %v1017
        %v1027 = vunpack.c.l.b16 0
        %v1028 = vunpack.c.h.b16 0
        %vm1029 = vcmp.ne.s32.totalorder %v1025, %v1027
        %vm1030 = vcmp.ne.s32.totalorder %v1026, %v1028
        %vm1031 = vmpackc.low %vm1030, %vm1029
        %v1032 = vunpack.c.l.b16 %v1015
        %v1033 = vunpack.c.h.b16 %v1015
        %v1034 = vunpack.c.l.b16 0
        %v1035 = vunpack.c.h.b16 0
        %vm1036 = vcmp.ne.s32.totalorder %v1032, %v1034
        %vm1037 = vcmp.ne.s32.totalorder %v1033, %v1035
        %vm1038 = vmpackc.low %vm1037, %vm1036
        %v1039 = vsel %vm1024, %v451, 0
        %v1040 = vsel %vm1031, %v444, 0
        %v1041 = vsel %vm1038, %v457, 0
        %v1042 = vsel %vm1024, %v454, 0
        %v1043 = vsel %vm1031, %v445, 0
        %v1044 = vsel %vm1038, %v460, 0
        %s1045 = scalar_lea.vmem [#allocation3], 80
        %v1046 = vld [vmem:[%s1045] sm:$0xf]
        %v1047 = vld [vmem:[%s1045 + $0x4] sm:$0xf]
        %v1048 = vld [vmem:[%s1045 + $0x8] sm:$0xf]
        %v1049 = vld [vmem:[%s1045 + $0xc] sm:$0xf]
        %v1054 = vunpack.c.l.b16 %v1046
        %v1055 = vunpack.c.l.b16 %v1047
        %v1056 = vunpack.c.l.b16 %v1048
        %v1057 = vunpack.c.l.b16 %v1049
        %v1058 = vpack.c.b16 %v1055, %v1054
        %v1059 = vpack.c.b16 %v1057, %v1056
        %1066 = vrot.lane.b32.xlu0 %v1039, 110
        %v1067 = vpop.permute.xlu0 %1066
        %1068 = vrot.lane.b32.xlu0 %v1040, 110
        %v1069 = vpop.permute.xlu0 %1068
        %1070 = vrot.lane.b32.xlu0 %v1041, 110
        %v1071 = vpop.permute.xlu0 %1070
        %1072 = vrot.lane.b32.xlu0 %v1042, 110
        %v1073 = vpop.permute.xlu0 %1072
        %1074 = vrot.lane.b32.xlu0 %v1043, 110
        %v1075 = vpop.permute.xlu0 %1074
        %1076 = vrot.lane.b32.xlu0 %v1044, 110
        %v1077 = vpop.permute.xlu0 %1076
        %vm1078 = vcmask 900096
        %v1079 = vsel %vm1078, %v1067, %v1069
        %v1080 = vsel %vm1078, %v1069, %v1071
        %v1081 = vsel %vm1078, %v1073, %v1075
        %v1082 = vsel %vm1078, %v1075, %v1077
        %v1088 = vsel %vm563, %v1058, 0
        %v1091 = vsel %vm563, %v1059, 0
        %1093 = vmatpush.bf16.msra.mxu0 0
        %1094 = vmatpush.bf16.msra.mxu0 0
        %1095 = vmatpush.bf16.msra.mxu0 0
        %1096 = vmatpush.bf16.msra.mxu0 0
        %1097 = vmatpush.bf16.msra.mxu0 0
        %1098 = vmatpush.bf16.msra.mxu0 0
        %1099 = vmatpush.bf16.msra.mxu0 %v1081
        %1100 = vmatpush.bf16.msra.mxu0 %v1079
        %1101 = vmatmul.bf16.gmra.mxu0 %v1088
        %v1102 = vpop.f32.mrf.mxu0
        %v1103 = vadd.f32 0.0, %v1102
        %v1104 = vpop.f32.mrf.mxu0
        %v1105 = vadd.f32 0.0, %v1104
        %1106 = vmatmul.bf16.gmra.mxu0 %v1091
        %v1107 = vpop.f32.mrf.mxu0
        %v1108 = vadd.f32 0.0, %v1107
        %v1109 = vpop.f32.mrf.mxu0
        %v1110 = vadd.f32 0.0, %v1109
        %1111 = vdwg.mxu0
        %1112 = vmatpush.bf16.msra.mxu0 0
        %1113 = vmatpush.bf16.msra.mxu0 0
        %1114 = vmatpush.bf16.msra.mxu0 0
        %1115 = vmatpush.bf16.msra.mxu0 0
        %1116 = vmatpush.bf16.msra.mxu0 0
        %1117 = vmatpush.bf16.msra.mxu0 0
        %1118 = vmatpush.bf16.msra.mxu0 %v1082
        %1119 = vmatpush.bf16.msra.mxu0 %v1080
        %1120 = vmatmul.bf16.gmra.mxu0 %v1088
        %v1121 = vpop.f32.mrf.mxu0
        %v1122 = vadd.f32 0.0, %v1121
        %v1123 = vpop.f32.mrf.mxu0
        %v1124 = vadd.f32 0.0, %v1123
        %1125 = vmatmul.bf16.gmra.mxu0 %v1091
        %v1126 = vpop.f32.mrf.mxu0
        %v1127 = vadd.f32 0.0, %v1126
        %v1128 = vpop.f32.mrf.mxu0
        %v1129 = vadd.f32 0.0, %v1128
        %1130 = vdwg.mxu0
        %v1131 = vadd.f32 %v1004, %v1103
        %v1132 = vadd.f32 %v1005, %v1122
        %v1133 = vadd.f32 %v1006, %v1105
        %v1134 = vadd.f32 %v1007, %v1124
        %v1135 = vadd.f32 %v1008, %v1108
        %v1136 = vadd.f32 %v1009, %v1127
        %v1137 = vadd.f32 %v1010, %v1110
        %v1138 = vadd.f32 %v1011, %v1129
        %1139 = vrot.lane.b32.xlu0 %v499, 32
        %v1140 = vpop.permute.xlu0 %1139
        %1141 = vrot.lane.b32.xlu0 %v500, 32
        %v1142 = vpop.permute.xlu0 %1141
        %vm1143 = vcmask 261120
        %v1144 = vsel %vm1143, %v1140, %v1142
        %v1145 = vunpack.c.l.b16 %v1140
        %v1146 = vunpack.c.h.b16 %v1140
        %v1147 = vunpack.c.l.b16 0
        %v1148 = vunpack.c.h.b16 0
        %vm1149 = vcmp.ne.s32.totalorder %v1145, %v1147
        %vm1150 = vcmp.ne.s32.totalorder %v1146, %v1148
        %vm1151 = vmpackc.low %vm1150, %vm1149
        %v1152 = vunpack.c.l.b16 %v1144
        %v1153 = vunpack.c.h.b16 %v1144
        %v1154 = vunpack.c.l.b16 0
        %v1155 = vunpack.c.h.b16 0
        %vm1156 = vcmp.ne.s32.totalorder %v1152, %v1154
        %vm1157 = vcmp.ne.s32.totalorder %v1153, %v1155
        %vm1158 = vmpackc.low %vm1157, %vm1156
        %v1159 = vunpack.c.l.b16 %v1142
        %v1160 = vunpack.c.h.b16 %v1142
        %v1161 = vunpack.c.l.b16 0
        %v1162 = vunpack.c.h.b16 0
        %vm1163 = vcmp.ne.s32.totalorder %v1159, %v1161
        %vm1164 = vcmp.ne.s32.totalorder %v1160, %v1162
        %vm1165 = vmpackc.low %vm1164, %vm1163
        %v1166 = vsel %vm1151, %v451, 0
        %v1167 = vsel %vm1158, %v444, 0
        %v1168 = vsel %vm1165, %v457, 0
        %v1169 = vsel %vm1151, %v454, 0
        %v1170 = vsel %vm1158, %v445, 0
        %v1171 = vsel %vm1165, %v460, 0
        %s1172 = scalar_lea.vmem [#allocation3], 96
        %v1173 = vld [vmem:[%s1172] sm:$0xf]
        %v1174 = vld [vmem:[%s1172 + $0x4] sm:$0xf]
        %v1175 = vld [vmem:[%s1172 + $0x8] sm:$0xf]
        %v1176 = vld [vmem:[%s1172 + $0xc] sm:$0xf]
        %v1181 = vunpack.c.l.b16 %v1173
        %v1182 = vunpack.c.l.b16 %v1174
        %v1183 = vunpack.c.l.b16 %v1175
        %v1184 = vunpack.c.l.b16 %v1176
        %v1185 = vpack.c.b16 %v1182, %v1181
        %v1186 = vpack.c.b16 %v1184, %v1183
        %1193 = vrot.lane.b32.xlu0 %v1166, 96
        %v1194 = vpop.permute.xlu0 %1193
        %1195 = vrot.lane.b32.xlu0 %v1167, 96
        %v1196 = vpop.permute.xlu0 %1195
        %1197 = vrot.lane.b32.xlu0 %v1168, 96
        %v1198 = vpop.permute.xlu0 %1197
        %1199 = vrot.lane.b32.xlu0 %v1169, 96
        %v1200 = vpop.permute.xlu0 %1199
        %1201 = vrot.lane.b32.xlu0 %v1170, 96
        %v1202 = vpop.permute.xlu0 %1201
        %1203 = vrot.lane.b32.xlu0 %v1171, 96
        %v1204 = vpop.permute.xlu0 %1203
        %vm1205 = vcmask 785408
        %v1206 = vsel %vm1205, %v1194, %v1196
        %v1207 = vsel %vm1205, %v1196, %v1198
        %v1208 = vsel %vm1205, %v1200, %v1202
        %v1209 = vsel %vm1205, %v1202, %v1204
        %v1215 = vsel %vm563, %v1185, 0
        %v1218 = vsel %vm563, %v1186, 0
        %1220 = vmatpush.bf16.msra.mxu0 0
        %1221 = vmatpush.bf16.msra.mxu0 0
        %1222 = vmatpush.bf16.msra.mxu0 0
        %1223 = vmatpush.bf16.msra.mxu0 0
        %1224 = vmatpush.bf16.msra.mxu0 0
        %1225 = vmatpush.bf16.msra.mxu0 0
        %1226 = vmatpush.bf16.msra.mxu0 %v1208
        %1227 = vmatpush.bf16.msra.mxu0 %v1206
        %1228 = vmatmul.bf16.gmra.mxu0 %v1215
        %v1229 = vpop.f32.mrf.mxu0
        %v1230 = vadd.f32 0.0, %v1229
        %v1231 = vpop.f32.mrf.mxu0
        %v1232 = vadd.f32 0.0, %v1231
        %1233 = vmatmul.bf16.gmra.mxu0 %v1218
        %v1234 = vpop.f32.mrf.mxu0
        %v1235 = vadd.f32 0.0, %v1234
        %v1236 = vpop.f32.mrf.mxu0
        %v1237 = vadd.f32 0.0, %v1236
        %1238 = vdwg.mxu0
        %1239 = vmatpush.bf16.msra.mxu0 0
        %1240 = vmatpush.bf16.msra.mxu0 0
        %1241 = vmatpush.bf16.msra.mxu0 0
        %1242 = vmatpush.bf16.msra.mxu0 0
        %1243 = vmatpush.bf16.msra.mxu0 0
        %1244 = vmatpush.bf16.msra.mxu0 0
        %1245 = vmatpush.bf16.msra.mxu0 %v1209
        %1246 = vmatpush.bf16.msra.mxu0 %v1207
        %1247 = vmatmul.bf16.gmra.mxu0 %v1215
        %v1248 = vpop.f32.mrf.mxu0
        %v1249 = vadd.f32 0.0, %v1248
        %v1250 = vpop.f32.mrf.mxu0
        %v1251 = vadd.f32 0.0, %v1250
        %1252 = vmatmul.bf16.gmra.mxu0 %v1218
        %v1253 = vpop.f32.mrf.mxu0
        %v1254 = vadd.f32 0.0, %v1253
        %v1255 = vpop.f32.mrf.mxu0
        %v1256 = vadd.f32 0.0, %v1255
        %1257 = vdwg.mxu0
        %v1258 = vadd.f32 %v1131, %v1230
        %v1259 = vadd.f32 %v1132, %v1249
        %v1260 = vadd.f32 %v1133, %v1232
        %v1261 = vadd.f32 %v1134, %v1251
        %v1262 = vadd.f32 %v1135, %v1235
        %v1263 = vadd.f32 %v1136, %v1254
        %v1264 = vadd.f32 %v1137, %v1237
        %v1265 = vadd.f32 %v1138, %v1256
        %s1266 = scalar_lea.vmem [#allocation3], 112
        %v1267 = vld [vmem:[%s1266] sm:$0xf]
        %v1268 = vld [vmem:[%s1266 + $0x4] sm:$0xf]
        %v1269 = vld [vmem:[%s1266 + $0x8] sm:$0xf]
        %v1270 = vld [vmem:[%s1266 + $0xc] sm:$0xf]
        %v1275 = vunpack.c.l.b16 %v1267
        %v1276 = vunpack.c.l.b16 %v1268
        %v1277 = vunpack.c.l.b16 %v1269
        %v1278 = vunpack.c.l.b16 %v1270
        %v1279 = vpack.c.b16 %v1276, %v1275
        %v1280 = vpack.c.b16 %v1278, %v1277
        %1281 = vrot.lane.b32.xlu0 %v451, 95
        %v1282 = vpop.permute.xlu0 %1281
        %1283 = vrot.lane.b32.xlu0 %v444, 95
        %v1284 = vpop.permute.xlu0 %1283
        %1285 = vrot.lane.b32.xlu0 %v457, 95
        %v1286 = vpop.permute.xlu0 %1285
        %1287 = vrot.lane.b32.xlu0 %v454, 95
        %v1288 = vpop.permute.xlu0 %1287
        %1289 = vrot.lane.b32.xlu0 %v445, 95
        %v1290 = vpop.permute.xlu0 %1289
        %1291 = vrot.lane.b32.xlu0 %v460, 95
        %v1292 = vpop.permute.xlu0 %1291
        %vm1293 = vcmask 777216
        %v1294 = vsel %vm1293, %v1282, %v1284
        %v1295 = vsel %vm1293, %v1284, %v1286
        %v1296 = vsel %vm1293, %v1288, %v1290
        %v1297 = vsel %vm1293, %v1290, %v1292
        %v1303 = vsel %vm563, %v1279, 0
        %v1306 = vsel %vm563, %v1280, 0
        %1308 = vmatpush.bf16.msra.mxu0 0
        %1309 = vmatpush.bf16.msra.mxu0 0
        %1310 = vmatpush.bf16.msra.mxu0 0
        %1311 = vmatpush.bf16.msra.mxu0 0
        %1312 = vmatpush.bf16.msra.mxu0 0
        %1313 = vmatpush.bf16.msra.mxu0 0
        %1314 = vmatpush.bf16.msra.mxu0 %v1296
        %1315 = vmatpush.bf16.msra.mxu0 %v1294
        %1316 = vmatmul.bf16.gmra.mxu0 %v1303
        %v1317 = vpop.f32.mrf.mxu0
        %v1318 = vadd.f32 0.0, %v1317
        %v1319 = vpop.f32.mrf.mxu0
        %v1320 = vadd.f32 0.0, %v1319
        %1321 = vmatmul.bf16.gmra.mxu0 %v1306
        %v1322 = vpop.f32.mrf.mxu0
        %v1323 = vadd.f32 0.0, %v1322
        %v1324 = vpop.f32.mrf.mxu0
        %v1325 = vadd.f32 0.0, %v1324
        %1326 = vdwg.mxu0
        %1327 = vmatpush.bf16.msra.mxu0 0
        %1328 = vmatpush.bf16.msra.mxu0 0
        %1329 = vmatpush.bf16.msra.mxu0 0
        %1330 = vmatpush.bf16.msra.mxu0 0
        %1331 = vmatpush.bf16.msra.mxu0 0
        %1332 = vmatpush.bf16.msra.mxu0 0
        %1333 = vmatpush.bf16.msra.mxu0 %v1297
        %1334 = vmatpush.bf16.msra.mxu0 %v1295
        %1335 = vmatmul.bf16.gmra.mxu0 %v1303
        %v1336 = vpop.f32.mrf.mxu0
        %v1337 = vadd.f32 0.0, %v1336
        %v1338 = vpop.f32.mrf.mxu0
        %v1339 = vadd.f32 0.0, %v1338
        %1340 = vmatmul.bf16.gmra.mxu0 %v1306
        %v1341 = vpop.f32.mrf.mxu0
        %v1342 = vadd.f32 0.0, %v1341
        %v1343 = vpop.f32.mrf.mxu0
        %v1344 = vadd.f32 0.0, %v1343
        %1345 = vdwg.mxu0
        %v1346 = vadd.f32 %v1258, %v1318
        %v1347 = vadd.f32 %v1259, %v1337
        %v1348 = vadd.f32 %v1260, %v1320
        %v1349 = vadd.f32 %v1261, %v1339
        %v1350 = vadd.f32 %v1262, %v1323
        %v1351 = vadd.f32 %v1263, %v1342
        %v1352 = vadd.f32 %v1264, %v1325
        %v1353 = vadd.f32 %v1265, %v1344
        %1354 = vrot.lane.b32.xlu0 %v668, 34
        %v1355 = vpop.permute.xlu0 %1354
        %1356 = vrot.lane.b32.xlu0 %v669, 34
        %v1357 = vpop.permute.xlu0 %1356
        %vm1358 = vcmask 277504
        %v1359 = vsel %vm1358, %v1355, %v1357
        %v1360 = vunpack.c.l.b16 %v1355
        %v1361 = vunpack.c.h.b16 %v1355
        %v1362 = vunpack.c.l.b16 0
        %v1363 = vunpack.c.h.b16 0
        %vm1364 = vcmp.ne.s32.totalorder %v1360, %v1362
        %vm1365 = vcmp.ne.s32.totalorder %v1361, %v1363
        %vm1366 = vmpackc.low %vm1365, %vm1364
        %v1367 = vunpack.c.l.b16 %v1359
        %v1368 = vunpack.c.h.b16 %v1359
        %v1369 = vunpack.c.l.b16 0
        %v1370 = vunpack.c.h.b16 0
        %vm1371 = vcmp.ne.s32.totalorder %v1367, %v1369
        %vm1372 = vcmp.ne.s32.totalorder %v1368, %v1370
        %vm1373 = vmpackc.low %vm1372, %vm1371
        %v1374 = vunpack.c.l.b16 %v1357
        %v1375 = vunpack.c.h.b16 %v1357
        %v1376 = vunpack.c.l.b16 0
        %v1377 = vunpack.c.h.b16 0
        %vm1378 = vcmp.ne.s32.totalorder %v1374, %v1376
        %vm1379 = vcmp.ne.s32.totalorder %v1375, %v1377
        %vm1380 = vmpackc.low %vm1379, %vm1378
        %v1381 = vsel %vm1366, %v451, 0
        %v1382 = vsel %vm1373, %v444, 0
        %v1383 = vsel %vm1380, %v457, 0
        %v1384 = vsel %vm1366, %v454, 0
        %v1385 = vsel %vm1373, %v445, 0
        %v1386 = vsel %vm1380, %v460, 0
        %s1387 = scalar_lea.vmem [#allocation3], 128
        %v1388 = vld [vmem:[%s1387] sm:$0xf]
        %v1389 = vld [vmem:[%s1387 + $0x4] sm:$0xf]
        %v1390 = vld [vmem:[%s1387 + $0x8] sm:$0xf]
        %v1391 = vld [vmem:[%s1387 + $0xc] sm:$0xf]
        %v1396 = vunpack.c.l.b16 %v1388
        %v1397 = vunpack.c.l.b16 %v1389
        %v1398 = vunpack.c.l.b16 %v1390
        %v1399 = vunpack.c.l.b16 %v1391
        %v1400 = vpack.c.b16 %v1397, %v1396
        %v1401 = vpack.c.b16 %v1399, %v1398
        %1408 = vrot.lane.b32.xlu0 %v1381, 94
        %v1409 = vpop.permute.xlu0 %1408
        %1410 = vrot.lane.b32.xlu0 %v1382, 94
        %v1411 = vpop.permute.xlu0 %1410
        %1412 = vrot.lane.b32.xlu0 %v1383, 94
        %v1413 = vpop.permute.xlu0 %1412
        %1414 = vrot.lane.b32.xlu0 %v1384, 94
        %v1415 = vpop.permute.xlu0 %1414
        %1416 = vrot.lane.b32.xlu0 %v1385, 94
        %v1417 = vpop.permute.xlu0 %1416
        %1418 = vrot.lane.b32.xlu0 %v1386, 94
        %v1419 = vpop.permute.xlu0 %1418
        %vm1420 = vcmask 769024
        %v1421 = vsel %vm1420, %v1409, %v1411
        %v1422 = vsel %vm1420, %v1411, %v1413
        %v1423 = vsel %vm1420, %v1415, %v1417
        %v1424 = vsel %vm1420, %v1417, %v1419
        %v1430 = vsel %vm563, %v1400, 0
        %v1433 = vsel %vm563, %v1401, 0
        %1435 = vmatpush.bf16.msra.mxu0 0
        %1436 = vmatpush.bf16.msra.mxu0 0
        %1437 = vmatpush.bf16.msra.mxu0 0
        %1438 = vmatpush.bf16.msra.mxu0 0
        %1439 = vmatpush.bf16.msra.mxu0 0
        %1440 = vmatpush.bf16.msra.mxu0 0
        %1441 = vmatpush.bf16.msra.mxu0 %v1423
        %1442 = vmatpush.bf16.msra.mxu0 %v1421
        %1443 = vmatmul.bf16.gmra.mxu0 %v1430
        %v1444 = vpop.f32.mrf.mxu0
        %v1445 = vadd.f32 0.0, %v1444
        %v1446 = vpop.f32.mrf.mxu0
        %v1447 = vadd.f32 0.0, %v1446
        %1448 = vmatmul.bf16.gmra.mxu0 %v1433
        %v1449 = vpop.f32.mrf.mxu0
        %v1450 = vadd.f32 0.0, %v1449
        %v1451 = vpop.f32.mrf.mxu0
        %v1452 = vadd.f32 0.0, %v1451
        %1453 = vdwg.mxu0
        %1454 = vmatpush.bf16.msra.mxu0 0
        %1455 = vmatpush.bf16.msra.mxu0 0
        %1456 = vmatpush.bf16.msra.mxu0 0
        %1457 = vmatpush.bf16.msra.mxu0 0
        %1458 = vmatpush.bf16.msra.mxu0 0
        %1459 = vmatpush.bf16.msra.mxu0 0
        %1460 = vmatpush.bf16.msra.mxu0 %v1424
        %1461 = vmatpush.bf16.msra.mxu0 %v1422
        %1462 = vmatmul.bf16.gmra.mxu0 %v1430
        %v1463 = vpop.f32.mrf.mxu0
        %v1464 = vadd.f32 0.0, %v1463
        %v1465 = vpop.f32.mrf.mxu0
        %v1466 = vadd.f32 0.0, %v1465
        %1467 = vmatmul.bf16.gmra.mxu0 %v1433
        %v1468 = vpop.f32.mrf.mxu0
        %v1469 = vadd.f32 0.0, %v1468
        %v1470 = vpop.f32.mrf.mxu0
        %v1471 = vadd.f32 0.0, %v1470
        %1472 = vdwg.mxu0
        %v1473 = vadd.f32 %v1346, %v1445
        %v1474 = vadd.f32 %v1347, %v1464
        %v1475 = vadd.f32 %v1348, %v1447
        %v1476 = vadd.f32 %v1349, %v1466
        %v1477 = vadd.f32 %v1350, %v1450
        %v1478 = vadd.f32 %v1351, %v1469
        %v1479 = vadd.f32 %v1352, %v1452
        %v1480 = vadd.f32 %v1353, %v1471
        %v1481 = vld [vmem:[%s2] sm:$0xff]
        %v1482 = vld [vmem:[%s2 + $0x8] sm:$0xff]
        %v1483 = vld [vmem:[%s2 + $0x10] sm:$0xff]
        %v1484 = vld [vmem:[%s2 + $0x18] sm:$0xff]
        %1486 = vset.pattern.permute.xlu0 0
        %1487 = vperm.xlu0 %1486, %v1481
        %v1488 = vpop.permute.xlu0 %1487
        %1491 = vset.pattern.permute.xlu0 0
        %1492 = vperm.xlu0 %1491, %v1482
        %v1493 = vpop.permute.xlu0 %1492
        %1496 = vset.pattern.permute.xlu0 0
        %1497 = vperm.xlu0 %1496, %v1483
        %v1498 = vpop.permute.xlu0 %1497
        %1501 = vset.pattern.permute.xlu0 0
        %1502 = vperm.xlu0 %1501, %v1484
        %v1503 = vpop.permute.xlu0 %1502
        %v1505 = vadd.f32 %v1473, %v1488
        %v1506 = vadd.f32 %v1474, %v1488
        %v1507 = vadd.f32 %v1475, %v1493
        %v1508 = vadd.f32 %v1476, %v1493
        %v1509 = vadd.f32 %v1477, %v1498
        %v1510 = vadd.f32 %v1478, %v1498
        %v1511 = vadd.f32 %v1479, %v1503
        %v1512 = vadd.f32 %v1480, %v1503
        %v1513 = vmax.f32 %v1505, 0.0
        %v1514 = vmax.f32 %v1506, 0.0
        %v1515 = vmax.f32 %v1507, 0.0
        %v1516 = vmax.f32 %v1508, 0.0
        %v1517 = vmax.f32 %v1509, 0.0
        %v1518 = vmax.f32 %v1510, 0.0
        %v1519 = vmax.f32 %v1511, 0.0
        %v1520 = vmax.f32 %v1512, 0.0
        %v1521 = vadd.f32 %v1513, %v411
        %v1522 = vadd.f32 %v1514, %v412
        %v1523 = vadd.f32 %v1515, %v413
        %v1524 = vadd.f32 %v1516, %v414
        %v1525 = vadd.f32 %v1517, %v415
        %v1526 = vadd.f32 %v1518, %v416
        %v1527 = vadd.f32 %v1519, %v417
        %v1528 = vadd.f32 %v1520, %v418
        %v1529 = vadd.f32 %v1521, %v1522
        %1530 = vadd.xlane.f32.xlu0 %v1529
        %v1531 = vpop.xlane.xlu0 %1530
        %v1532 = vadd.f32 %v1523, %v1524
        %1533 = vadd.xlane.f32.xlu0 %v1532
        %v1534 = vpop.xlane.xlu0 %1533
        %v1535 = vadd.f32 %v1525, %v1526
        %1536 = vadd.xlane.f32.xlu0 %v1535
        %v1537 = vpop.xlane.xlu0 %1536
        %v1538 = vadd.f32 %v1527, %v1528
        %1539 = vadd.xlane.f32.xlu0 %v1538
        %v1540 = vpop.xlane.xlu0 %1539
        %v1541 = vrcp.pop 256.0
        %v1542 = vmul.f32 256.0, %v1541
        %v1543 = vsub.f32 1.0, %v1542
        %v1544 = vmul.f32 %v1541, %v1543
        %v1545 = vadd.f32 %v1541, %v1544
        %vm1546 = vweird.f32 %v1541
        %v1547 = vsel %vm1546, %v1541, %v1545
        %v1548 = vmul.f32 %v1531, %v1547
        %v1549 = vmul.f32 %v1534, %v1547
        %v1550 = vmul.f32 %v1537, %v1547
        %v1551 = vmul.f32 %v1540, %v1547
        %v1552 = vld [vmem:[%s3] sm:$0xff]
        %v1553 = vld [vmem:[%s3 + $0x8] sm:$0xff]
        %v1554 = vld [vmem:[%s3 + $0x10] sm:$0xff]
        %v1555 = vld [vmem:[%s3 + $0x18] sm:$0xff]
        %v1556 = vmul.f32 %v1552, %v1548
        %v1557 = vmul.f32 %v1553, %v1549
        %v1558 = vmul.f32 %v1554, %v1550
        %v1559 = vmul.f32 %v1555, %v1551
        %vm1560 = vcmask 31744
        %v1561 = vsel %vm1560, %v1556, 0.0
        %v1562 = vsel %vm1560, %v1557, 0.0
        %v1563 = vadd.f32 %v1561, %v1562
        %v1564 = vsel %vm1560, %v1558, 0.0
        %v1565 = vadd.f32 %v1563, %v1564
        %v1566 = vsel %vm1560, %v1559, 0.0
        %v1567 = vadd.f32 %v1565, %v1566
        %v1568 = vrot.slane %v1567, 4
        %v1569 = vadd.f32 %v1567, %v1568
        %v1570 = vrot.slane %v1569, 2
        %v1571 = vadd.f32 %v1569, %v1570
        %v1572 = vrot.slane %v1571, 1
        %v1573 = vadd.f32 %v1571, %v1572
        %v1574 = vld [vmem:[%s4] sm:$0x1]
        %v1575 = vadd.f32 %v1573, %v1574
        %v1576 = vmax.f32 %v1575, 0.0
        %v1577 = vld [vmem:[%s5] sm:$0xff]
        %v1578 = vld [vmem:[%s5 + $0x8] sm:$0xff]
        %v1579 = vld [vmem:[%s5 + $0x10] sm:$0xff]
        %v1580 = vld [vmem:[%s5 + $0x18] sm:$0xff]
        %v1581 = vperm.slane %v1576, 0
        %v1582 = vmul.f32 %v1577, %v1581
        %v1583 = vmul.f32 %v1578, %v1581
        %v1584 = vmul.f32 %v1579, %v1581
        %v1585 = vmul.f32 %v1580, %v1581
        %v1586 = vsel %vm1560, %v1582, 0.0
        %1587 = vadd.xlane.f32.xlu0 %v1586
        %v1588 = vpop.xlane.xlu0 %1587
        %v1589 = vsel %vm1560, %v1583, 0.0
        %1590 = vadd.xlane.f32.xlu0 %v1589
        %v1591 = vpop.xlane.xlu0 %1590
        %v1592 = vsel %vm1560, %v1584, 0.0
        %1593 = vadd.xlane.f32.xlu0 %v1592
        %v1594 = vpop.xlane.xlu0 %1593
        %v1595 = vsel %vm1560, %v1585, 0.0
        %1596 = vadd.xlane.f32.xlu0 %v1595
        %v1597 = vpop.xlane.xlu0 %1596
        %v1598 = vld [vmem:[%s6] sm:$0xff]
        %v1599 = vld [vmem:[%s6 + $0x8] sm:$0xff]
        %v1600 = vld [vmem:[%s6 + $0x10] sm:$0xff]
        %v1601 = vld [vmem:[%s6 + $0x18] sm:$0xff]
        %v1602 = vadd.f32 %v1588, %v1598
        %v1603 = vadd.f32 %v1591, %v1599
        %v1604 = vadd.f32 %v1594, %v1600
        %v1605 = vadd.f32 %v1597, %v1601
        %v1606 = vxor.u32 %v1602, 2147483648
        %v1607 = vxor.u32 %v1603, 2147483648
        %v1608 = vxor.u32 %v1604, 2147483648
        %v1609 = vxor.u32 %v1605, 2147483648
        %v1610 = vmul.f32 %v1606, 1.442695
        %v1611 = vpow.pop %v1610
        %v1612 = vmul.f32 %v1607, 1.442695
        %v1613 = vpow.pop %v1612
        %v1614 = vmul.f32 %v1608, 1.442695
        %v1615 = vpow.pop %v1614
        %v1616 = vmul.f32 %v1609, 1.442695
        %v1617 = vpow.pop %v1616
        %v1618 = vadd.f32 %v1611, 1.0
        %v1619 = vadd.f32 %v1613, 1.0
        %v1620 = vadd.f32 %v1615, 1.0
        %v1621 = vadd.f32 %v1617, 1.0
        %v1622 = vrcp.pop %v1618
        %v1623 = vmul.f32 %v1618, %v1622
        %v1624 = vsub.f32 1.0, %v1623
        %v1625 = vmul.f32 %v1622, %v1624
        %v1626 = vadd.f32 %v1622, %v1625
        %vm1627 = vweird.f32 %v1618
        %vm1628 = vweird.f32 %v1622
        %vm1629 = vmor %vm1627, %vm1628
        %v1630 = vsel %vm1629, %v1622, %v1626
        %v1631 = vand.u32 2147483647, %v1618
        %vm1632 = vcmp.eq.f32.partialorder %v1631, 8.507059e+37
        %v1633 = vand.u32 %v1618, 2147483648
        %v1634 = vor.u32 1.1754944e-38, %v1633
        %v1635 = vsel %vm1632, %v1634, %v1630
        %v1636 = vmul.f32 1.0, %v1635
        %v1637 = vrcp.pop %v1619
        %v1638 = vmul.f32 %v1619, %v1637
        %v1639 = vsub.f32 1.0, %v1638
        %v1640 = vmul.f32 %v1637, %v1639
        %v1641 = vadd.f32 %v1637, %v1640
        %vm1642 = vweird.f32 %v1619
        %vm1643 = vweird.f32 %v1637
        %vm1644 = vmor %vm1642, %vm1643
        %v1645 = vsel %vm1644, %v1637, %v1641
        %v1646 = vand.u32 2147483647, %v1619
        %vm1647 = vcmp.eq.f32.partialorder %v1646, 8.507059e+37
        %v1648 = vand.u32 %v1619, 2147483648
        %v1649 = vor.u32 1.1754944e-38, %v1648
        %v1650 = vsel %vm1647, %v1649, %v1645
        %v1651 = vmul.f32 1.0, %v1650
        %v1652 = vrcp.pop %v1620
        %v1653 = vmul.f32 %v1620, %v1652
        %v1654 = vsub.f32 1.0, %v1653
        %v1655 = vmul.f32 %v1652, %v1654
        %v1656 = vadd.f32 %v1652, %v1655
        %vm1657 = vweird.f32 %v1620
        %vm1658 = vweird.f32 %v1652
        %vm1659 = vmor %vm1657, %vm1658
        %v1660 = vsel %vm1659, %v1652, %v1656
        %v1661 = vand.u32 2147483647, %v1620
        %vm1662 = vcmp.eq.f32.partialorder %v1661, 8.507059e+37
        %v1663 = vand.u32 %v1620, 2147483648
        %v1664 = vor.u32 1.1754944e-38, %v1663
        %v1665 = vsel %vm1662, %v1664, %v1660
        %v1666 = vmul.f32 1.0, %v1665
        %v1667 = vrcp.pop %v1621
        %v1668 = vmul.f32 %v1621, %v1667
        %v1669 = vsub.f32 1.0, %v1668
        %v1670 = vmul.f32 %v1667, %v1669
        %v1671 = vadd.f32 %v1667, %v1670
        %vm1672 = vweird.f32 %v1621
        %vm1673 = vweird.f32 %v1667
        %vm1674 = vmor %vm1672, %vm1673
        %v1675 = vsel %vm1674, %v1667, %v1671
        %v1676 = vand.u32 2147483647, %v1621
        %vm1677 = vcmp.eq.f32.partialorder %v1676, 8.507059e+37
        %v1678 = vand.u32 %v1621, 2147483648
        %v1679 = vor.u32 1.1754944e-38, %v1678
        %v1680 = vsel %vm1677, %v1679, %v1675
        %v1681 = vmul.f32 1.0, %v1680
        %1683 = vset.pattern.permute.xlu0 0
        %1684 = vperm.xlu0 %1683, %v1636
        %v1685 = vpop.permute.xlu0 %1684
        %1688 = vset.pattern.permute.xlu0 0
        %1689 = vperm.xlu0 %1688, %v1651
        %v1690 = vpop.permute.xlu0 %1689
        %1693 = vset.pattern.permute.xlu0 0
        %1694 = vperm.xlu0 %1693, %v1666
        %v1695 = vpop.permute.xlu0 %1694
        %1698 = vset.pattern.permute.xlu0 0
        %1699 = vperm.xlu0 %1698, %v1681
        %v1700 = vpop.permute.xlu0 %1699
        %v1702 = vmul.f32 %v1521, %v1685
        %v1703 = vmul.f32 %v1522, %v1685
        %v1704 = vmul.f32 %v1523, %v1690
        %v1705 = vmul.f32 %v1524, %v1690
        %v1706 = vmul.f32 %v1525, %v1695
        %v1707 = vmul.f32 %v1526, %v1695
        %v1708 = vmul.f32 %v1527, %v1700
        %v1709 = vmul.f32 %v1528, %v1700
        %v1710 = vld [vmem:[%s7] sm:$0xf]
        %v1711 = vld [vmem:[%s8] sm:$0xf]
        %1713 = vset.pattern.permute.xlu0 0
        %1714 = vperm.xlu0 %1713, %v1711
        %v1715 = vpop.permute.xlu0 %1714
        %v1718 = vsel %vm563, %v1710, 0
        %1720 = vmatpush.msra.mxu0 0.0
        %1721 = vmatpush.msra.mxu0 0.0
        %1722 = vmatpush.msra.mxu0 0.0
        %1723 = vmatpush.msra.mxu0 0.0
        %1724 = vmatpush.msra.mxu0 0.0
        %1725 = vmatpush.msra.mxu0 0.0
        %1726 = vmatpush.msra.mxu0 0.0
        %1727 = vmatpush.msra.mxu0 0.0
        %1728 = vmatpush.msra.mxu0 0.0
        %1729 = vmatpush.msra.mxu0 0.0
        %1730 = vmatpush.msra.mxu0 0.0
        %1731 = vmatpush.msra.mxu0 0.0
        %1732 = vmatpush.msra.mxu0 %v1708
        %1733 = vmatpush.msra.mxu0 %v1706
        %1734 = vmatpush.msra.mxu0 %v1704
        %1735 = vmatpush.msra.mxu0 %v1702
        %1736 = vmatmul.f32.gmra.mxu0 %v1718
        %v1737 = vpop.f32.mrf.mxu0
        %v1738 = vadd.f32 %v1715, %v1737
        %1739 = vdwg.mxu0
        %1740 = vmatpush.msra.mxu0 0.0
        %1741 = vmatpush.msra.mxu0 0.0
        %1742 = vmatpush.msra.mxu0 0.0
        %1743 = vmatpush.msra.mxu0 0.0
        %1744 = vmatpush.msra.mxu0 0.0
        %1745 = vmatpush.msra.mxu0 0.0
        %1746 = vmatpush.msra.mxu0 0.0
        %1747 = vmatpush.msra.mxu0 0.0
        %1748 = vmatpush.msra.mxu0 0.0
        %1749 = vmatpush.msra.mxu0 0.0
        %1750 = vmatpush.msra.mxu0 0.0
        %1751 = vmatpush.msra.mxu0 0.0
        %1752 = vmatpush.msra.mxu0 %v1709
        %1753 = vmatpush.msra.mxu0 %v1707
        %1754 = vmatpush.msra.mxu0 %v1705
        %1755 = vmatpush.msra.mxu0 %v1703
        %1756 = vmatmul.f32.gmra.mxu0 %v1718
        %v1757 = vpop.f32.mrf.mxu0
        %v1758 = vadd.f32 %v1715, %v1757
        %1759 = vdwg.mxu0
        %v1760 = vmax.f32 %v1738, 0.0
        %v1761 = vmax.f32 %v1758, 0.0
        %v1762 = vld [vmem:[%s9] sm:$0xf]
        %1764 = vset.pattern.permute.xlu0 0
        %1765 = vperm.xlu0 %1764, %v1762
        %v1766 = vpop.permute.xlu0 %1765
        %v1768 = vmul.f32 %v1760, %v1766
        %v1769 = vmul.f32 %v1761, %v1766
        %vm1770 = vcmask 1043456
        %v1771 = vsel %vm1770, %v1768, 0.0
        %v1772 = vrot.slane %v1771, 4
        %v1773 = vadd.f32 %v1771, %v1772
        %v1774 = vrot.slane %v1773, 2
        %v1775 = vadd.f32 %v1773, %v1774
        %v1776 = vrot.slane %v1775, 1
        %v1777 = vadd.f32 %v1775, %v1776
        %v1778 = vsel %vm1770, %v1769, 0.0
        %v1779 = vrot.slane %v1778, 4
        %v1780 = vadd.f32 %v1778, %v1779
        %v1781 = vrot.slane %v1780, 2
        %v1782 = vadd.f32 %v1780, %v1781
        %v1783 = vrot.slane %v1782, 1
        %v1784 = vadd.f32 %v1782, %v1783
        %v1785 = vld [vmem:[#allocation2] sm:$0x1]
        %1787 = vset.pattern.permute.xlu0 0
        %1788 = vperm.xlu0 %1787, %v1785
        %v1789 = vpop.permute.xlu0 %1788
        %v1791 = vperm.slane %v1789, 0
        %v1792 = vadd.f32 %v1777, %v1791
        %v1793 = vadd.f32 %v1784, %v1791
        %v1794 = vxor.u32 %v1792, 2147483648
        %v1795 = vxor.u32 %v1793, 2147483648
        %v1796 = vmul.f32 %v1794, 1.442695
        %v1797 = vpow.pop %v1796
        %v1798 = vmul.f32 %v1795, 1.442695
        %v1799 = vpow.pop %v1798
        %v1800 = vadd.f32 %v1797, 1.0
        %v1801 = vadd.f32 %v1799, 1.0
        %v1802 = vrcp.pop %v1800
        %v1803 = vmul.f32 %v1800, %v1802
        %v1804 = vsub.f32 1.0, %v1803
        %v1805 = vmul.f32 %v1802, %v1804
        %v1806 = vadd.f32 %v1802, %v1805
        %vm1807 = vweird.f32 %v1800
        %vm1808 = vweird.f32 %v1802
        %vm1809 = vmor %vm1807, %vm1808
        %v1810 = vsel %vm1809, %v1802, %v1806
        %v1811 = vand.u32 2147483647, %v1800
        %vm1812 = vcmp.eq.f32.partialorder %v1811, 8.507059e+37
        %v1813 = vand.u32 %v1800, 2147483648
        %v1814 = vor.u32 1.1754944e-38, %v1813
        %v1815 = vsel %vm1812, %v1814, %v1810
        %v1816 = vmul.f32 1.0, %v1815
        %v1817 = vrcp.pop %v1801
        %v1818 = vmul.f32 %v1801, %v1817
        %v1819 = vsub.f32 1.0, %v1818
        %v1820 = vmul.f32 %v1817, %v1819
        %v1821 = vadd.f32 %v1817, %v1820
        %vm1822 = vweird.f32 %v1801
        %vm1823 = vweird.f32 %v1817
        %vm1824 = vmor %vm1822, %vm1823
        %v1825 = vsel %vm1824, %v1817, %v1821
        %v1826 = vand.u32 2147483647, %v1801
        %vm1827 = vcmp.eq.f32.partialorder %v1826, 8.507059e+37
        %v1828 = vand.u32 %v1801, 2147483648
        %v1829 = vor.u32 1.1754944e-38, %v1828
        %v1830 = vsel %vm1827, %v1829, %v1825
        %v1831 = vmul.f32 1.0, %v1830
        %v1832 = vmul.f32 %v1702, %v1816
        %v1833 = vmul.f32 %v1703, %v1831
        %v1834 = vmul.f32 %v1704, %v1816
        %v1835 = vmul.f32 %v1705, %v1831
        %v1836 = vmul.f32 %v1706, %v1816
        %v1837 = vmul.f32 %v1707, %v1831
        %v1838 = vmul.f32 %v1708, %v1816
        %v1839 = vmul.f32 %v1709, %v1831
        %v1840 = vadd.f32 %v1832, %v411
        %v1841 = vadd.f32 %v1833, %v412
        %v1842 = vadd.f32 %v1834, %v413
        %v1843 = vadd.f32 %v1835, %v414
        %v1844 = vadd.f32 %v1836, %v415
        %v1845 = vadd.f32 %v1837, %v416
        %v1846 = vadd.f32 %v1838, %v417
        %v1847 = vadd.f32 %v1839, %v418
        %v1848 = vpack.c.bf16 %v1841, %v1840
        %v1849 = vpack.c.bf16 %v1843, %v1842
        %v1850 = vpack.c.bf16 %v1845, %v1844
        %v1851 = vpack.c.bf16 %v1847, %v1846
        %1852 = vst [vmem:[%s398] sm:$0xff] %v1848
        %1853 = vst [vmem:[%s398 + $0x8] sm:$0xff] %v1849
        %1854 = vst [vmem:[%s398 + $0x10] sm:$0xff] %v1850
        %1855 = vst [vmem:[%s398 + $0x18] sm:$0xff] %v1851
        %s1856 = sand.u32 %s272, 1
        %s1857 = scalar_lea.sflag [#allocation5], %s1856
        %s1858 = sand.u32 %s272, 1
        %s1859 = smul.addr %s1858, 32
        %s1860 = scalar_lea.vmem [#allocation6], %s1859
        // Predicated region
        $region69: #{tpu_custom_call.1} parent=63 // pred_check
          %p1861 = pneg %p282
        $region70: #{tpu_custom_call.1} parent=63 // pred_check_branch
          %1863 = sbr.rel (%p1861) target = $region72
        $region71: #{tpu_custom_call.1} parent=63 // pred_region
          %1865 = vsyncadd %s1857, 0
          %s1866 = smul.addr %s28, 8
          %s1867 = smul.addr %s1866, 4
          %s1868 = scalar_lea.hbm %s11, %s1867
          %s1869 = sshll.u32 %s1860, 4
          %s1870 = int_to_ptr.vmem [resolvable:$true] %s1869
          %s1871 = sshll.u32 %s1868, 4
          %s1872 = int_to_ptr.hbm [resolvable:$true] %s1871
          %1877 = dma.vmem_to_hbm [thread:$0]  %s1870, 512, %s1872, %s1857, 128, 128, 8
        $region72: #{tpu_custom_call.1} parent=63 // pred_fallthru
          _
      $region64: #{tpu_custom_call.1} parent=5 // pred_fallthru
        _
      %p1878 = scmp.le.s32.totalorder 2, %s23
      // Predicated region
      $region73: #{tpu_custom_call.1} parent=5 // pred_check
        %p1879 = pneg %p1878
      $region74: #{tpu_custom_call.1} parent=5 // pred_check_branch
        %1881 = sbr.rel (%p1879) target = $region76
      $region75: #{tpu_custom_call.1} parent=5 // pred_region
        %s1882 = ssub.s32 %s23, 2
        // Predicated region
        $region77: #{tpu_custom_call.1} parent=75 // pred_check
          %p1883 = pneg %p288
        $region78: #{tpu_custom_call.1} parent=75 // pred_check_branch
          %1885 = sbr.rel (%p1883) target = $region80
        $region79: #{tpu_custom_call.1} parent=75 // pred_region
          %s1886 = sand.u32 %s273, 1
          %s1887 = scalar_lea.sflag [#allocation5], %s1886
          %s1888 = sand.u32 %s273, 1
          %s1889 = smul.addr %s1888, 32
          %s1890 = scalar_lea.vmem [#allocation6], %s1889
          %1892 = dma.done %s1887, 512
        $region80: #{tpu_custom_call.1} parent=75 // pred_fallthru
          _
      $region76: #{tpu_custom_call.1} parent=5 // pred_fallthru
        _
    $region6: #{tpu_custom_call.1} parent=1 // loop_footer
      %s27 = sadd.s32 1, %s23
    $region7: #{tpu_custom_call.1} parent=1 // loop_footer_branch
      %22 = sbr.rel target = $region3
    $region8: #{tpu_custom_call.1} parent=1 // loop_exit
      _
    %1893 = vsyncpa [#allocation4], 1
    %s1894 = scalar_lea.sflag [#allocation4], 1
    %1895 = vsyncpa %s1894, 1
    %1896 = vsyncpa [#allocation5], 1
    %s1897 = scalar_lea.sflag [#allocation5], 1
    %1898 = vsyncpa %s1897, 1

</llo_original>
